<compile_context>
chip_gen: v7x
topology: tpu7x:2x2x1
jax: 0.10.0
libtpu: 0.0.40
codegen_flags: <defaults>
</compile_context>

<pallas_src>
import functools
import math

import jax
import jax.numpy as jnp
from jax import lax
from jax.experimental import pallas as pl
from jax.experimental.pallas import tpu as pltpu


# ----------------------------- kernel helpers ------------------------------ #
def _layer_norm(x, w, b, eps=1e-5):
    mean = jnp.mean(x, axis=-1, keepdims=True)
    var = jnp.mean((x - mean) ** 2, axis=-1, keepdims=True)
    return (x - mean) * lax.rsqrt(var + eps) * w + b


def _gelu(x):
    # exact (erf) GELU == torch.nn.GELU() default; kept in f32 for fidelity.
    return 0.5 * x * (1.0 + lax.erf(x * (1.0 / math.sqrt(2.0))))


# --------------------- fused multi-layer Pallas kernel ---------------------- #
def fused_encoder_kernel(num_heads,
                         x_ref, mask_ref,
                         wqkv_ref, bqkv_ref, wo_ref, small_ref,
                         w1_ref, b1_ref, w2_ref,
                         out_ref, ctx_ref):
    l = pl.program_id(1)
    H = num_heads
    Bb, _, S = mask_ref.shape            # batch-block, 1, seq
    M, D = out_ref.shape                 # M = Bb * S
    dh = D // H

    # Load the input activations into the resident output block once per
    # batch block; it then carries the activations across the layer axis.
    @pl.when(l == 0)
    def _():
        out_ref[...] = x_ref[...]

    x = out_ref[...]                     # (M, D) f32, resident across layers

    sp = small_ref[0]                    # (6, D) packed small params
    ln1w, ln1b = sp[0:1], sp[1:2]
    ln2w, ln2b = sp[2:3], sp[3:4]
    bo, b2 = sp[4:5], sp[5:6]

    # ---- self-attention sub-layer: x = x + MHA(norm1(x)) ----
    x2 = _layer_norm(x, ln1w, ln1b)                                   # (M, D) f32
    # Single full-width QKV projection (1/sqrt(dh) already folded into wq/bq).
    qkv = jnp.dot(x2.astype(jnp.bfloat16), wqkv_ref[0],
                  preferred_element_type=jnp.float32) + bqkv_ref[0]   # (M, 3D)
    qkv = qkv.astype(jnp.bfloat16)

    # Per-(sequence, head) attention core.  Static unrolled loops; the score /
    # context matmuls have the same MXU shapes as a head-batched einsum but
    # avoid 3-D relayouts, and only one (S, S) f32 score tile is live at once.
    for b in range(Bb):
        r0 = b * S
        addmask = mask_ref[b]            # (1, S) additive f32 mask (0 / -1e9)
        for h in range(H):
            c0 = h * dh
            q_h = qkv[r0:r0 + S, c0:c0 + dh]                  # (S, dh) bf16
            k_h = qkv[r0:r0 + S, D + c0:D + c0 + dh]
            v_h = qkv[r0:r0 + S, 2 * D + c0:2 * D + c0 + dh]
            s = lax.dot_general(q_h, k_h, (((1,), (1,)), ((), ())),
                                preferred_element_type=jnp.float32)   # (S, S)
            s = s + addmask
            m = jnp.max(s, axis=-1, keepdims=True)
            e = jnp.exp(s - m)
            p = e * pl.reciprocal(jnp.sum(e, axis=-1, keepdims=True),
                                  approx=True)
            ctx = jnp.dot(p.astype(jnp.bfloat16), v_h,
                          preferred_element_type=jnp.float32)         # (S, dh)
            ctx_ref[r0:r0 + S, c0:c0 + dh] = ctx.astype(jnp.bfloat16)

    # Single output projection over the concatenated heads (K = D full width).
    attn = jnp.dot(ctx_ref[...], wo_ref[0],
                   preferred_element_type=jnp.float32) + bo           # (M, D)
    x = x + attn                          # dropout1 -> identity

    # ---- feed-forward sub-layer: x = x + FF(norm2(x)) ----
    x2 = _layer_norm(x, ln2w, ln2b)
    h1 = jnp.dot(x2.astype(jnp.bfloat16), w1_ref[0],
                 preferred_element_type=jnp.float32) + b1_ref[0]      # (M, F)
    h1 = _gelu(h1)
    ff = jnp.dot(h1.astype(jnp.bfloat16), w2_ref[0],
                 preferred_element_type=jnp.float32) + b2             # (M, D)
    x = x + ff                            # dropout2 -> identity

    out_ref[...] = x


# ------------------------------ sizing helpers ------------------------------ #
def _vmem_limit_bytes():
    # v5e/v6e: 128 MiB physical VMEM; v7x: 64 MiB.  Use ~3/4, capped; the
    # fallback is safe on every generation.
    try:
        cap = pltpu.get_tpu_info().vmem_capacity_bytes
        return int(min(cap * 3 // 4, 100 * 1024 * 1024))
    except Exception:
        return 48 * 1024 * 1024


def _pick_block_batch(B, S, D, F, vmem_budget):
    """Largest divisor of B such that one grid step fits the VMEM budget."""
    wbytes = (D * 3 * D + D * D + D * F + F * D) * 2 + (3 * D + 6 * D + F) * 4
    for bb in range(B, 0, -1):
        if B % bb:
            continue
        if bb != B and (bb * S) % 8 != 0:   # keep second-minor dim tileable
            continue
        m = bb * S
        act = 2 * m * D * 4 * 2                 # x-in + out blocks, dbl-buffered
        inter = m * (3 * D + F + 2 * D) * 4     # qkv + GELU + misc f32 live sets
        if 2 * wbytes + act + inter <= vmem_budget:
            return bb
    return 1


def fused_encoder(x, addmask, sp, num_heads):
    """All encoder layers in one pallas_call.  grid = (batch-block, layer)."""
    B, S, D = x.shape
    L = sp["wqkv"].shape[0]
    F = sp["w1"].shape[-1]

    budget = _vmem_limit_bytes()
    Bb = _pick_block_batch(B, S, D, F, budget)
    M = Bb * S

    x2d = x.reshape(B * S, D)            # flatten tokens: lane-dense last dim

    in_specs = [
        pl.BlockSpec((M, D), lambda b, l: (b, 0)),                # activations
        pl.BlockSpec((Bb, 1, S), lambda b, l: (b, 0, 0)),         # additive mask
        pl.BlockSpec((1, D, 3 * D), lambda b, l: (l, 0, 0)),      # wqkv
        pl.BlockSpec((1, 1, 3 * D), lambda b, l: (l, 0, 0)),      # bqkv
        pl.BlockSpec((1, D, D), lambda b, l: (l, 0, 0)),          # wo
        pl.BlockSpec((1, 6, D), lambda b, l: (l, 0, 0)),          # ln1/ln2/bo/b2
        pl.BlockSpec((1, D, F), lambda b, l: (l, 0, 0)),          # w1
        pl.BlockSpec((1, 1, F), lambda b, l: (l, 0, 0)),          # b1
        pl.BlockSpec((1, F, D), lambda b, l: (l, 0, 0)),          # w2
    ]

    out = pl.pallas_call(
        functools.partial(fused_encoder_kernel, num_heads),
        out_shape=jax.ShapeDtypeStruct((B * S, D), jnp.float32),
        grid_spec=pltpu.PrefetchScalarGridSpec(
            num_scalar_prefetch=0,
            grid=(B // Bb, L),
            in_specs=in_specs,
            out_specs=pl.BlockSpec((M, D), lambda b, l: (b, 0)),
            scratch_shapes=[pltpu.VMEM((M, D), jnp.bfloat16)],    # head contexts
        ),
        compiler_params=pltpu.CompilerParams(
            dimension_semantics=("parallel", "arbitrary"),
            vmem_limit_bytes=budget,
        ),
    )(x2d, addmask, sp["wqkv"], sp["bqkv"], sp["wo"], sp["small"],
      sp["w1"], sp["b1"], sp["w2"])
    return out.reshape(B, S, D)


# ------------------------------ glue (plain JAX) ---------------------------- #
def make_positional_encoding(max_seq_len, embedding_dim):
    position = jnp.arange(max_seq_len, dtype=jnp.float32)[:, None]
    div_term = jnp.exp(jnp.arange(0, embedding_dim, 2, dtype=jnp.float32)
                       * (-jnp.log(10000.0) / embedding_dim))
    pe = jnp.zeros((max_seq_len, embedding_dim), jnp.float32)
    pe = pe.at[:, 0::2].set(jnp.sin(position * div_term))
    pe = pe.at[:, 1::2].set(jnp.cos(position * div_term))
    return pe


def init_params(key, vocab_size, embedding_dim, num_heads, num_layers):
    D = embedding_dim
    F = 4 * D
    keys = jax.random.split(key, 2 + num_layers)

    token_emb = jax.random.normal(keys[0], (vocab_size, D), jnp.float32) * 0.02
    segment_emb = jax.random.normal(keys[1], (3, D), jnp.float32) * 0.02
    segment_emb = segment_emb.at[0].set(0.0)          # padding_idx=0

    def init_layer(k):
        ks = jax.random.split(k, 12)
        s_d = 1.0 / math.sqrt(D)
        s_f = 1.0 / math.sqrt(F)
        return {
            "wq": jax.random.normal(ks[0], (D, D), jnp.float32) * s_d,
            "bq": jax.random.normal(ks[1], (D,), jnp.float32) * 0.01,
            "wk": jax.random.normal(ks[2], (D, D), jnp.float32) * s_d,
            "bk": jax.random.normal(ks[3], (D,), jnp.float32) * 0.01,
            "wv": jax.random.normal(ks[4], (D, D), jnp.float32) * s_d,
            "bv": jax.random.normal(ks[5], (D,), jnp.float32) * 0.01,
            "wo": jax.random.normal(ks[6], (D, D), jnp.float32) * s_d,
            "bo": jax.random.normal(ks[7], (D,), jnp.float32) * 0.01,
            "ln1w": jnp.ones((D,), jnp.float32),
            "ln1b": jnp.zeros((D,), jnp.float32),
            "ln2w": jnp.ones((D,), jnp.float32),
            "ln2b": jnp.zeros((D,), jnp.float32),
            "w1": jax.random.normal(ks[8], (D, F), jnp.float32) * s_d,
            "b1": jax.random.normal(ks[9], (F,), jnp.float32) * 0.01,
            "w2": jax.random.normal(ks[10], (F, D), jnp.float32) * s_f,
            "b2": jax.random.normal(ks[11], (D,), jnp.float32) * 0.01,
        }

    layers = [init_layer(keys[2 + i]) for i in range(num_layers)]
    return {
        "token_emb": token_emb,
        "segment_emb": segment_emb,
        "pe": make_positional_encoding(512, D),
        "layers": layers,
    }


def stack_layer_params(layers, num_heads):
    """Stack per-layer params with a leading layer axis, fuse wq|wk|wv into one
    (D, 3D) matrix (query scale folded in), pre-cast matmul weights to bf16 and
    pack the small vectors."""
    D = layers[0]["wq"].shape[0]
    dh = D // num_heads
    scale = 1.0 / math.sqrt(dh)

    def stk(fn, dtype):
        return jnp.stack([fn(lp) for lp in layers], axis=0).astype(dtype)

    return {
        "wqkv": stk(lambda lp: jnp.concatenate(
            [lp["wq"] * scale, lp["wk"], lp["wv"]], axis=1), jnp.bfloat16),
        "bqkv": stk(lambda lp: jnp.concatenate(
            [lp["bq"] * scale, lp["bk"], lp["bv"]], axis=0).reshape(1, -1),
            jnp.float32),
        "wo": stk(lambda lp: lp["wo"], jnp.bfloat16),
        "small": stk(lambda lp: jnp.stack(
            [lp["ln1w"], lp["ln1b"], lp["ln2w"], lp["ln2b"],
             lp["bo"], lp["b2"]], axis=0), jnp.float32),
        "w1": stk(lambda lp: lp["w1"], jnp.bfloat16),
        "b1": stk(lambda lp: lp["b1"].reshape(1, -1), jnp.float32),
        "w2": stk(lambda lp: lp["w2"], jnp.bfloat16),
    }


def encoder_forward(source, segment_label, source_mask, params, num_heads):
    B, S = source.shape
    # embedding gathers are data-dependent -> plain JAX outside the kernel
    tok = params["token_emb"][source]                   # (B, S, D)
    pos = params["pe"][:S][None, :, :]                  # (1, S, D)
    seg = params["segment_emb"][segment_label]          # (B, S, D)
    x = (tok + pos + seg).astype(jnp.float32)           # dropout -> identity
    # additive mask hoisted out of the kernel: 0 keep / -1e9 masked, (B, 1, S)
    addmask = jnp.where(source_mask.reshape(B, 1, S) == 0,
                        jnp.float32(-1e9), jnp.float32(0.0))
    stacked = stack_layer_params(params["layers"], num_heads)
    return fused_encoder(x, addmask, stacked, num_heads)


# ---------------------------------- main ------------------------------------ #
if __name__ == "__main__":
    vocab_size, embedding_dim, num_heads, num_layers = 100, 32, 4, 2
    B, S = 2, 8

    key = jax.random.PRNGKey(0)
    k_param, k_src, k_seg = jax.random.split(key, 3)

    params = init_params(k_param, vocab_size, embedding_dim, num_heads, num_layers)

    source = jax.random.randint(k_src, (B, S), 0, vocab_size, dtype=jnp.int32)
    segment_label = jax.random.randint(k_seg, (B, S), 0, 3, dtype=jnp.int32)
    # source_mask in the PyTorch convention (B, 1, S); mask last 2 keys of batch 1
    source_mask = jnp.ones((B, 1, S), jnp.int32).at[1, 0, -2:].set(0)

    out = encoder_forward(source, segment_label, source_mask, params, num_heads)
    out = jax.block_until_ready(out)

    assert out.shape == (B, S, embedding_dim)
    assert bool(jnp.all(jnp.isfinite(out)))
    print("KERNEL_OK")
</pallas_src>

<mosaic_0001>
module attributes {stable_mosaic.version = 11 : i64} {
  func.func @fused_encoder_kernel(%arg0: i32, %arg1: i32, %arg2: memref<16x32xf32, #tpu.memory_space<vmem>>, %arg3: memref<2x1x8xf32, #tpu.memory_space<vmem>>, %arg4: memref<1x32x96xbf16, #tpu.memory_space<vmem>>, %arg5: memref<1x1x96xf32, #tpu.memory_space<vmem>>, %arg6: memref<1x32x32xbf16, #tpu.memory_space<vmem>>, %arg7: memref<1x6x32xf32, #tpu.memory_space<vmem>>, %arg8: memref<1x32x128xbf16, #tpu.memory_space<vmem>>, %arg9: memref<1x1x128xf32, #tpu.memory_space<vmem>>, %arg10: memref<1x128x32xbf16, #tpu.memory_space<vmem>>, %arg11: memref<16x32xf32, #tpu.memory_space<vmem>>, %arg12: memref<16x32xbf16, #tpu.memory_space<vmem>>) attributes {dimension_semantics = [#tpu.dimension_semantics<parallel>, #tpu.dimension_semantics<arbitrary>], iteration_bounds = array<i64: 1, 2>, scalar_prefetch = 0 : i64, scratch_operands = 1 : i64, tpu.core_type = #tpu.core_type<tc>, window_params = [{transform_indices = @transform_0, window_bounds = array<i64: 16, 32>}, {transform_indices = @transform_1, window_bounds = array<i64: 2, 1, 8>}, {transform_indices = @transform_2, window_bounds = array<i64: 1, 32, 96>}, {transform_indices = @transform_3, window_bounds = array<i64: 1, 1, 96>}, {transform_indices = @transform_4, window_bounds = array<i64: 1, 32, 32>}, {transform_indices = @transform_5, window_bounds = array<i64: 1, 6, 32>}, {transform_indices = @transform_6, window_bounds = array<i64: 1, 32, 128>}, {transform_indices = @transform_7, window_bounds = array<i64: 1, 1, 128>}, {transform_indices = @transform_8, window_bounds = array<i64: 1, 128, 32>}, {transform_indices = @transform_9, window_bounds = array<i64: 16, 32>}]} {
    %c0_i32 = arith.constant 0 : i32
    %0 = arith.cmpi eq, %arg1, %c0_i32 : i32
    %1 = arith.extui %0 : i1 to i32
    %c0_i32_0 = arith.constant 0 : i32
    %2 = arith.cmpi ne, %1, %c0_i32_0 : i32
    scf.if %2 {
      %c0_93 = arith.constant 0 : index
      %c0_94 = arith.constant 0 : index
      %260 = vector.load %arg2[%c0_93, %c0_94] : memref<16x32xf32, #tpu.memory_space<vmem>>, vector<16x32xf32>
      %c0_95 = arith.constant 0 : index
      %c0_96 = arith.constant 0 : index
      %261 = vector.load %arg11[%c0_95, %c0_96] : memref<16x32xf32, #tpu.memory_space<vmem>>, vector<16x32xf32>
      tpu.vector_store %arg11[%c0_95, %c0_96], %260 {strides = array<i32>} : memref<16x32xf32, #tpu.memory_space<vmem>>, vector<16x32xf32>,
    } else {
    }
    %c0 = arith.constant 0 : index
    %c0_1 = arith.constant 0 : index
    %3 = vector.load %arg11[%c0, %c0_1] : memref<16x32xf32, #tpu.memory_space<vmem>>, vector<16x32xf32>
    %c0_2 = arith.constant 0 : index
    %c0_3 = arith.constant 0 : index
    %c0_4 = arith.constant 0 : index
    %4 = vector.load %arg7[%c0_2, %c0_3, %c0_4] : memref<1x6x32xf32, #tpu.memory_space<vmem>>, vector<1x6x32xf32>
    %5 = vector.shape_cast %4 : vector<1x6x32xf32> to vector<6x32xf32>
    %6 = vector.extract_strided_slice %5 {offsets = [0, 0], sizes = [1, 32], strides = [1, 1]} : vector<6x32xf32> to vector<1x32xf32>
    %7 = vector.extract_strided_slice %5 {offsets = [1, 0], sizes = [1, 32], strides = [1, 1]} : vector<6x32xf32> to vector<1x32xf32>
    %8 = vector.extract_strided_slice %5 {offsets = [2, 0], sizes = [1, 32], strides = [1, 1]} : vector<6x32xf32> to vector<1x32xf32>
    %9 = vector.extract_strided_slice %5 {offsets = [3, 0], sizes = [1, 32], strides = [1, 1]} : vector<6x32xf32> to vector<1x32xf32>
    %10 = vector.extract_strided_slice %5 {offsets = [4, 0], sizes = [1, 32], strides = [1, 1]} : vector<6x32xf32> to vector<1x32xf32>
    %11 = vector.extract_strided_slice %5 {offsets = [5, 0], sizes = [1, 32], strides = [1, 1]} : vector<6x32xf32> to vector<1x32xf32>
    %cst = arith.constant dense<0.000000e+00> : vector<16xf32>
    %12 = vector.multi_reduction <add>, %3, %cst [1] : vector<16x32xf32> to vector<16xf32>
    %13 = vector.shape_cast %12 : vector<16xf32> to vector<16x1xf32>
    %cst_5 = arith.constant 3.200000e+01 : f32
    %14 = vector.broadcast %cst_5 : f32 to vector<16x1xf32>
    %15 = arith.divf %13, %14 : vector<16x1xf32>
    %16 = vector.broadcast %15 : vector<16x1xf32> to vector<16x32xf32>
    %17 = arith.subf %3, %16 : vector<16x32xf32>
    %18 = arith.mulf %17, %17 : vector<16x32xf32>
    %cst_6 = arith.constant dense<0.000000e+00> : vector<16xf32>
    %19 = vector.multi_reduction <add>, %18, %cst_6 [1] : vector<16x32xf32> to vector<16xf32>
    %20 = vector.shape_cast %19 : vector<16xf32> to vector<16x1xf32>
    %cst_7 = arith.constant 3.200000e+01 : f32
    %21 = vector.broadcast %cst_7 : f32 to vector<16x1xf32>
    %22 = arith.divf %20, %21 : vector<16x1xf32>
    %23 = vector.broadcast %15 : vector<16x1xf32> to vector<16x32xf32>
    %24 = arith.subf %3, %23 : vector<16x32xf32>
    %cst_8 = arith.constant 9.99999974E-6 : f32
    %25 = vector.broadcast %cst_8 : f32 to vector<16x1xf32>
    %26 = arith.addf %22, %25 : vector<16x1xf32>
    %27 = math.rsqrt %26 : vector<16x1xf32>
    %28 = vector.broadcast %27 : vector<16x1xf32> to vector<16x32xf32>
    %29 = arith.mulf %24, %28 : vector<16x32xf32>
    %30 = vector.broadcast %6 : vector<1x32xf32> to vector<16x32xf32>
    %31 = arith.mulf %29, %30 : vector<16x32xf32>
    %32 = vector.broadcast %7 : vector<1x32xf32> to vector<16x32xf32>
    %33 = arith.addf %31, %32 : vector<16x32xf32>
    %34 = arith.truncf %33 : vector<16x32xf32> to vector<16x32xbf16>
    %c0_9 = arith.constant 0 : index
    %c0_10 = arith.constant 0 : index
    %c0_11 = arith.constant 0 : index
    %35 = vector.load %arg4[%c0_9, %c0_10, %c0_11] : memref<1x32x96xbf16, #tpu.memory_space<vmem>>, vector<1x32x96xbf16>
    %36 = vector.shape_cast %35 : vector<1x32x96xbf16> to vector<32x96xbf16>
    %cst_12 = arith.constant dense<0.000000e+00> : vector<16x96xf32>
    %37 = tpu.matmul %34, %36, %cst_12 {dimension_numbers = #tpu.dot_dimension_numbers<[1], [0], [0], [1], [0, 0, 1, 1], [], []>} : vector<16x32xbf16>, vector<32x96xbf16>, vector<16x96xf32> -> vector<16x96xf32>
    %c0_13 = arith.constant 0 : index
    %c0_14 = arith.constant 0 : index
    %c0_15 = arith.constant 0 : index
    %38 = vector.load %arg5[%c0_13, %c0_14, %c0_15] : memref<1x1x96xf32, #tpu.memory_space<vmem>>, vector<1x1x96xf32>
    %39 = vector.shape_cast %38 : vector<1x1x96xf32> to vector<1x96xf32>
    %40 = vector.broadcast %39 : vector<1x96xf32> to vector<16x96xf32>
    %41 = arith.addf %37, %40 : vector<16x96xf32>
    %42 = arith.truncf %41 : vector<16x96xf32> to vector<16x96xbf16>
    %c0_16 = arith.constant 0 : index
    %c0_17 = arith.constant 0 : index
    %c0_18 = arith.constant 0 : index
    %43 = vector.load %arg3[%c0_16, %c0_17, %c0_18] : memref<2x1x8xf32, #tpu.memory_space<vmem>>, vector<1x1x8xf32>
    %44 = vector.shape_cast %43 : vector<1x1x8xf32> to vector<1x8xf32>
    %45 = vector.extract_strided_slice %42 {offsets = [0, 0], sizes = [8, 8], strides = [1, 1]} : vector<16x96xbf16> to vector<8x8xbf16>
    %46 = vector.extract_strided_slice %42 {offsets = [0, 32], sizes = [8, 8], strides = [1, 1]} : vector<16x96xbf16> to vector<8x8xbf16>
    %47 = vector.extract_strided_slice %42 {offsets = [0, 64], sizes = [8, 8], strides = [1, 1]} : vector<16x96xbf16> to vector<8x8xbf16>
    %cst_19 = arith.constant dense<0.000000e+00> : vector<8x8xf32>
    %48 = tpu.matmul %45, %46, %cst_19 {dimension_numbers = #tpu.dot_dimension_numbers<[1], [1], [0], [0], [0, 0, 1, 0], [], []>} : vector<8x8xbf16>, vector<8x8xbf16>, vector<8x8xf32> -> vector<8x8xf32>
    %49 = vector.broadcast %44 : vector<1x8xf32> to vector<8x8xf32>
    %50 = arith.addf %48, %49 : vector<8x8xf32>
    %cst_20 = arith.constant dense<0xFF800000> : vector<8xf32>
    %51 = vector.multi_reduction <maximumf>, %50, %cst_20 [1] : vector<8x8xf32> to vector<8xf32>
    %52 = vector.shape_cast %51 : vector<8xf32> to vector<8x1xf32>
    %53 = vector.broadcast %52 : vector<8x1xf32> to vector<8x8xf32>
    %54 = arith.subf %50, %53 : vector<8x8xf32>
    %55 = math.exp %54 : vector<8x8xf32>
    %cst_21 = arith.constant dense<0.000000e+00> : vector<8xf32>
    %56 = vector.multi_reduction <add>, %55, %cst_21 [1] : vector<8x8xf32> to vector<8xf32>
    %57 = vector.shape_cast %56 : vector<8xf32> to vector<8x1xf32>
    %58 = tpu.reciprocal %57 {approx = true} : vector<8x1xf32> -> vector<8x1xf32>
    %59 = vector.broadcast %58 : vector<8x1xf32> to vector<8x8xf32>
    %60 = arith.mulf %55, %59 : vector<8x8xf32>
    %61 = arith.truncf %60 : vector<8x8xf32> to vector<8x8xbf16>
    %cst_22 = arith.constant dense<0.000000e+00> : vector<8x8xf32>
    %62 = tpu.matmul %61, %47, %cst_22 {dimension_numbers = #tpu.dot_dimension_numbers<[1], [0], [0], [1], [0, 0, 1, 1], [], []>} : vector<8x8xbf16>, vector<8x8xbf16>, vector<8x8xf32> -> vector<8x8xf32>
    %63 = arith.truncf %62 : vector<8x8xf32> to vector<8x8xbf16>
    %c0_23 = arith.constant 0 : index
    %c0_24 = arith.constant 0 : index
    %64 = vector.load %arg12[%c0_23, %c0_24] : memref<16x32xbf16, #tpu.memory_space<vmem>>, vector<8x8xbf16>
    tpu.vector_store %arg12[%c0_23, %c0_24], %63 {strides = array<i32>} : memref<16x32xbf16, #tpu.memory_space<vmem>>, vector<8x8xbf16>,
    %65 = vector.extract_strided_slice %42 {offsets = [0, 8], sizes = [8, 8], strides = [1, 1]} : vector<16x96xbf16> to vector<8x8xbf16>
    %66 = vector.extract_strided_slice %42 {offsets = [0, 40], sizes = [8, 8], strides = [1, 1]} : vector<16x96xbf16> to vector<8x8xbf16>
    %67 = vector.extract_strided_slice %42 {offsets = [0, 72], sizes = [8, 8], strides = [1, 1]} : vector<16x96xbf16> to vector<8x8xbf16>
    %cst_25 = arith.constant dense<0.000000e+00> : vector<8x8xf32>
    %68 = tpu.matmul %65, %66, %cst_25 {dimension_numbers = #tpu.dot_dimension_numbers<[1], [1], [0], [0], [0, 0, 1, 0], [], []>} : vector<8x8xbf16>, vector<8x8xbf16>, vector<8x8xf32> -> vector<8x8xf32>
    %69 = vector.broadcast %44 : vector<1x8xf32> to vector<8x8xf32>
    %70 = arith.addf %68, %69 : vector<8x8xf32>
    %cst_26 = arith.constant dense<0xFF800000> : vector<8xf32>
    %71 = vector.multi_reduction <maximumf>, %70, %cst_26 [1] : vector<8x8xf32> to vector<8xf32>
    %72 = vector.shape_cast %71 : vector<8xf32> to vector<8x1xf32>
    %73 = vector.broadcast %72 : vector<8x1xf32> to vector<8x8xf32>
    %74 = arith.subf %70, %73 : vector<8x8xf32>
    %75 = math.exp %74 : vector<8x8xf32>
    %cst_27 = arith.constant dense<0.000000e+00> : vector<8xf32>
    %76 = vector.multi_reduction <add>, %75, %cst_27 [1] : vector<8x8xf32> to vector<8xf32>
    %77 = vector.shape_cast %76 : vector<8xf32> to vector<8x1xf32>
    %78 = tpu.reciprocal %77 {approx = true} : vector<8x1xf32> -> vector<8x1xf32>
    %79 = vector.broadcast %78 : vector<8x1xf32> to vector<8x8xf32>
    %80 = arith.mulf %75, %79 : vector<8x8xf32>
    %81 = arith.truncf %80 : vector<8x8xf32> to vector<8x8xbf16>
    %cst_28 = arith.constant dense<0.000000e+00> : vector<8x8xf32>
    %82 = tpu.matmul %81, %67, %cst_28 {dimension_numbers = #tpu.dot_dimension_numbers<[1], [0], [0], [1], [0, 0, 1, 1], [], []>} : vector<8x8xbf16>, vector<8x8xbf16>, vector<8x8xf32> -> vector<8x8xf32>
    %83 = arith.truncf %82 : vector<8x8xf32> to vector<8x8xbf16>
    %c0_29 = arith.constant 0 : index
    %c8 = arith.constant 8 : index
    %84 = vector.load %arg12[%c0_29, %c8] : memref<16x32xbf16, #tpu.memory_space<vmem>>, vector<8x8xbf16>
    tpu.vector_store %arg12[%c0_29, %c8], %83 {strides = array<i32>} : memref<16x32xbf16, #tpu.memory_space<vmem>>, vector<8x8xbf16>,
    %85 = vector.extract_strided_slice %42 {offsets = [0, 16], sizes = [8, 8], strides = [1, 1]} : vector<16x96xbf16> to vector<8x8xbf16>
    %86 = vector.extract_strided_slice %42 {offsets = [0, 48], sizes = [8, 8], strides = [1, 1]} : vector<16x96xbf16> to vector<8x8xbf16>
    %87 = vector.extract_strided_slice %42 {offsets = [0, 80], sizes = [8, 8], strides = [1, 1]} : vector<16x96xbf16> to vector<8x8xbf16>
    %cst_30 = arith.constant dense<0.000000e+00> : vector<8x8xf32>
    %88 = tpu.matmul %85, %86, %cst_30 {dimension_numbers = #tpu.dot_dimension_numbers<[1], [1], [0], [0], [0, 0, 1, 0], [], []>} : vector<8x8xbf16>, vector<8x8xbf16>, vector<8x8xf32> -> vector<8x8xf32>
    %89 = vector.broadcast %44 : vector<1x8xf32> to vector<8x8xf32>
    %90 = arith.addf %88, %89 : vector<8x8xf32>
    %cst_31 = arith.constant dense<0xFF800000> : vector<8xf32>
    %91 = vector.multi_reduction <maximumf>, %90, %cst_31 [1] : vector<8x8xf32> to vector<8xf32>
    %92 = vector.shape_cast %91 : vector<8xf32> to vector<8x1xf32>
    %93 = vector.broadcast %92 : vector<8x1xf32> to vector<8x8xf32>
    %94 = arith.subf %90, %93 : vector<8x8xf32>
    %95 = math.exp %94 : vector<8x8xf32>
    %cst_32 = arith.constant dense<0.000000e+00> : vector<8xf32>
    %96 = vector.multi_reduction <add>, %95, %cst_32 [1] : vector<8x8xf32> to vector<8xf32>
    %97 = vector.shape_cast %96 : vector<8xf32> to vector<8x1xf32>
    %98 = tpu.reciprocal %97 {approx = true} : vector<8x1xf32> -> vector<8x1xf32>
    %99 = vector.broadcast %98 : vector<8x1xf32> to vector<8x8xf32>
    %100 = arith.mulf %95, %99 : vector<8x8xf32>
    %101 = arith.truncf %100 : vector<8x8xf32> to vector<8x8xbf16>
    %cst_33 = arith.constant dense<0.000000e+00> : vector<8x8xf32>
    %102 = tpu.matmul %101, %87, %cst_33 {dimension_numbers = #tpu.dot_dimension_numbers<[1], [0], [0], [1], [0, 0, 1, 1], [], []>} : vector<8x8xbf16>, vector<8x8xbf16>, vector<8x8xf32> -> vector<8x8xf32>
    %103 = arith.truncf %102 : vector<8x8xf32> to vector<8x8xbf16>
    %c0_34 = arith.constant 0 : index
    %c16 = arith.constant 16 : index
    %104 = vector.load %arg12[%c0_34, %c16] : memref<16x32xbf16, #tpu.memory_space<vmem>>, vector<8x8xbf16>
    tpu.vector_store %arg12[%c0_34, %c16], %103 {strides = array<i32>} : memref<16x32xbf16, #tpu.memory_space<vmem>>, vector<8x8xbf16>,
    %105 = vector.extract_strided_slice %42 {offsets = [0, 24], sizes = [8, 8], strides = [1, 1]} : vector<16x96xbf16> to vector<8x8xbf16>
    %106 = vector.extract_strided_slice %42 {offsets = [0, 56], sizes = [8, 8], strides = [1, 1]} : vector<16x96xbf16> to vector<8x8xbf16>
    %107 = vector.extract_strided_slice %42 {offsets = [0, 88], sizes = [8, 8], strides = [1, 1]} : vector<16x96xbf16> to vector<8x8xbf16>
    %cst_35 = arith.constant dense<0.000000e+00> : vector<8x8xf32>
    %108 = tpu.matmul %105, %106, %cst_35 {dimension_numbers = #tpu.dot_dimension_numbers<[1], [1], [0], [0], [0, 0, 1, 0], [], []>} : vector<8x8xbf16>, vector<8x8xbf16>, vector<8x8xf32> -> vector<8x8xf32>
    %109 = vector.broadcast %44 : vector<1x8xf32> to vector<8x8xf32>
    %110 = arith.addf %108, %109 : vector<8x8xf32>
    %cst_36 = arith.constant dense<0xFF800000> : vector<8xf32>
    %111 = vector.multi_reduction <maximumf>, %110, %cst_36 [1] : vector<8x8xf32> to vector<8xf32>
    %112 = vector.shape_cast %111 : vector<8xf32> to vector<8x1xf32>
    %113 = vector.broadcast %112 : vector<8x1xf32> to vector<8x8xf32>
    %114 = arith.subf %110, %113 : vector<8x8xf32>
    %115 = math.exp %114 : vector<8x8xf32>
    %cst_37 = arith.constant dense<0.000000e+00> : vector<8xf32>
    %116 = vector.multi_reduction <add>, %115, %cst_37 [1] : vector<8x8xf32> to vector<8xf32>
    %117 = vector.shape_cast %116 : vector<8xf32> to vector<8x1xf32>
    %118 = tpu.reciprocal %117 {approx = true} : vector<8x1xf32> -> vector<8x1xf32>
    %119 = vector.broadcast %118 : vector<8x1xf32> to vector<8x8xf32>
    %120 = arith.mulf %115, %119 : vector<8x8xf32>
    %121 = arith.truncf %120 : vector<8x8xf32> to vector<8x8xbf16>
    %cst_38 = arith.constant dense<0.000000e+00> : vector<8x8xf32>
    %122 = tpu.matmul %121, %107, %cst_38 {dimension_numbers = #tpu.dot_dimension_numbers<[1], [0], [0], [1], [0, 0, 1, 1], [], []>} : vector<8x8xbf16>, vector<8x8xbf16>, vector<8x8xf32> -> vector<8x8xf32>
    %123 = arith.truncf %122 : vector<8x8xf32> to vector<8x8xbf16>
    %c0_39 = arith.constant 0 : index
    %c24 = arith.constant 24 : index
    %124 = vector.load %arg12[%c0_39, %c24] : memref<16x32xbf16, #tpu.memory_space<vmem>>, vector<8x8xbf16>
    tpu.vector_store %arg12[%c0_39, %c24], %123 {strides = array<i32>} : memref<16x32xbf16, #tpu.memory_space<vmem>>, vector<8x8xbf16>,
    %c1 = arith.constant 1 : index
    %c0_40 = arith.constant 0 : index
    %c0_41 = arith.constant 0 : index
    %125 = vector.load %arg3[%c1, %c0_40, %c0_41] : memref<2x1x8xf32, #tpu.memory_space<vmem>>, vector<1x1x8xf32>
    %126 = vector.shape_cast %125 : vector<1x1x8xf32> to vector<1x8xf32>
    %127 = vector.extract_strided_slice %42 {offsets = [8, 0], sizes = [8, 8], strides = [1, 1]} : vector<16x96xbf16> to vector<8x8xbf16>
    %128 = vector.extract_strided_slice %42 {offsets = [8, 32], sizes = [8, 8], strides = [1, 1]} : vector<16x96xbf16> to vector<8x8xbf16>
    %129 = vector.extract_strided_slice %42 {offsets = [8, 64], sizes = [8, 8], strides = [1, 1]} : vector<16x96xbf16> to vector<8x8xbf16>
    %cst_42 = arith.constant dense<0.000000e+00> : vector<8x8xf32>
    %130 = tpu.matmul %127, %128, %cst_42 {dimension_numbers = #tpu.dot_dimension_numbers<[1], [1], [0], [0], [0, 0, 1, 0], [], []>} : vector<8x8xbf16>, vector<8x8xbf16>, vector<8x8xf32> -> vector<8x8xf32>
    %131 = vector.broadcast %126 : vector<1x8xf32> to vector<8x8xf32>
    %132 = arith.addf %130, %131 : vector<8x8xf32>
    %cst_43 = arith.constant dense<0xFF800000> : vector<8xf32>
    %133 = vector.multi_reduction <maximumf>, %132, %cst_43 [1] : vector<8x8xf32> to vector<8xf32>
    %134 = vector.shape_cast %133 : vector<8xf32> to vector<8x1xf32>
    %135 = vector.broadcast %134 : vector<8x1xf32> to vector<8x8xf32>
    %136 = arith.subf %132, %135 : vector<8x8xf32>
    %137 = math.exp %136 : vector<8x8xf32>
    %cst_44 = arith.constant dense<0.000000e+00> : vector<8xf32>
    %138 = vector.multi_reduction <add>, %137, %cst_44 [1] : vector<8x8xf32> to vector<8xf32>
    %139 = vector.shape_cast %138 : vector<8xf32> to vector<8x1xf32>
    %140 = tpu.reciprocal %139 {approx = true} : vector<8x1xf32> -> vector<8x1xf32>
    %141 = vector.broadcast %140 : vector<8x1xf32> to vector<8x8xf32>
    %142 = arith.mulf %137, %141 : vector<8x8xf32>
    %143 = arith.truncf %142 : vector<8x8xf32> to vector<8x8xbf16>
    %cst_45 = arith.constant dense<0.000000e+00> : vector<8x8xf32>
    %144 = tpu.matmul %143, %129, %cst_45 {dimension_numbers = #tpu.dot_dimension_numbers<[1], [0], [0], [1], [0, 0, 1, 1], [], []>} : vector<8x8xbf16>, vector<8x8xbf16>, vector<8x8xf32> -> vector<8x8xf32>
    %145 = arith.truncf %144 : vector<8x8xf32> to vector<8x8xbf16>
    %c8_46 = arith.constant 8 : index
    %c0_47 = arith.constant 0 : index
    %146 = vector.load %arg12[%c8_46, %c0_47] : memref<16x32xbf16, #tpu.memory_space<vmem>>, vector<8x8xbf16>
    tpu.vector_store %arg12[%c8_46, %c0_47], %145 {strides = array<i32>} : memref<16x32xbf16, #tpu.memory_space<vmem>>, vector<8x8xbf16>,
    %147 = vector.extract_strided_slice %42 {offsets = [8, 8], sizes = [8, 8], strides = [1, 1]} : vector<16x96xbf16> to vector<8x8xbf16>
    %148 = vector.extract_strided_slice %42 {offsets = [8, 40], sizes = [8, 8], strides = [1, 1]} : vector<16x96xbf16> to vector<8x8xbf16>
    %149 = vector.extract_strided_slice %42 {offsets = [8, 72], sizes = [8, 8], strides = [1, 1]} : vector<16x96xbf16> to vector<8x8xbf16>
    %cst_48 = arith.constant dense<0.000000e+00> : vector<8x8xf32>
    %150 = tpu.matmul %147, %148, %cst_48 {dimension_numbers = #tpu.dot_dimension_numbers<[1], [1], [0], [0], [0, 0, 1, 0], [], []>} : vector<8x8xbf16>, vector<8x8xbf16>, vector<8x8xf32> -> vector<8x8xf32>
    %151 = vector.broadcast %126 : vector<1x8xf32> to vector<8x8xf32>
    %152 = arith.addf %150, %151 : vector<8x8xf32>
    %cst_49 = arith.constant dense<0xFF800000> : vector<8xf32>
    %153 = vector.multi_reduction <maximumf>, %152, %cst_49 [1] : vector<8x8xf32> to vector<8xf32>
    %154 = vector.shape_cast %153 : vector<8xf32> to vector<8x1xf32>
    %155 = vector.broadcast %154 : vector<8x1xf32> to vector<8x8xf32>
    %156 = arith.subf %152, %155 : vector<8x8xf32>
    %157 = math.exp %156 : vector<8x8xf32>
    %cst_50 = arith.constant dense<0.000000e+00> : vector<8xf32>
    %158 = vector.multi_reduction <add>, %157, %cst_50 [1] : vector<8x8xf32> to vector<8xf32>
    %159 = vector.shape_cast %158 : vector<8xf32> to vector<8x1xf32>
    %160 = tpu.reciprocal %159 {approx = true} : vector<8x1xf32> -> vector<8x1xf32>
    %161 = vector.broadcast %160 : vector<8x1xf32> to vector<8x8xf32>
    %162 = arith.mulf %157, %161 : vector<8x8xf32>
    %163 = arith.truncf %162 : vector<8x8xf32> to vector<8x8xbf16>
    %cst_51 = arith.constant dense<0.000000e+00> : vector<8x8xf32>
    %164 = tpu.matmul %163, %149, %cst_51 {dimension_numbers = #tpu.dot_dimension_numbers<[1], [0], [0], [1], [0, 0, 1, 1], [], []>} : vector<8x8xbf16>, vector<8x8xbf16>, vector<8x8xf32> -> vector<8x8xf32>
    %165 = arith.truncf %164 : vector<8x8xf32> to vector<8x8xbf16>
    %c8_52 = arith.constant 8 : index
    %c8_53 = arith.constant 8 : index
    %166 = vector.load %arg12[%c8_52, %c8_53] : memref<16x32xbf16, #tpu.memory_space<vmem>>, vector<8x8xbf16>
    tpu.vector_store %arg12[%c8_52, %c8_53], %165 {strides = array<i32>} : memref<16x32xbf16, #tpu.memory_space<vmem>>, vector<8x8xbf16>,
    %167 = vector.extract_strided_slice %42 {offsets = [8, 16], sizes = [8, 8], strides = [1, 1]} : vector<16x96xbf16> to vector<8x8xbf16>
    %168 = vector.extract_strided_slice %42 {offsets = [8, 48], sizes = [8, 8], strides = [1, 1]} : vector<16x96xbf16> to vector<8x8xbf16>
    %169 = vector.extract_strided_slice %42 {offsets = [8, 80], sizes = [8, 8], strides = [1, 1]} : vector<16x96xbf16> to vector<8x8xbf16>
    %cst_54 = arith.constant dense<0.000000e+00> : vector<8x8xf32>
    %170 = tpu.matmul %167, %168, %cst_54 {dimension_numbers = #tpu.dot_dimension_numbers<[1], [1], [0], [0], [0, 0, 1, 0], [], []>} : vector<8x8xbf16>, vector<8x8xbf16>, vector<8x8xf32> -> vector<8x8xf32>
    %171 = vector.broadcast %126 : vector<1x8xf32> to vector<8x8xf32>
    %172 = arith.addf %170, %171 : vector<8x8xf32>
    %cst_55 = arith.constant dense<0xFF800000> : vector<8xf32>
    %173 = vector.multi_reduction <maximumf>, %172, %cst_55 [1] : vector<8x8xf32> to vector<8xf32>
    %174 = vector.shape_cast %173 : vector<8xf32> to vector<8x1xf32>
    %175 = vector.broadcast %174 : vector<8x1xf32> to vector<8x8xf32>
    %176 = arith.subf %172, %175 : vector<8x8xf32>
    %177 = math.exp %176 : vector<8x8xf32>
    %cst_56 = arith.constant dense<0.000000e+00> : vector<8xf32>
    %178 = vector.multi_reduction <add>, %177, %cst_56 [1] : vector<8x8xf32> to vector<8xf32>
    %179 = vector.shape_cast %178 : vector<8xf32> to vector<8x1xf32>
    %180 = tpu.reciprocal %179 {approx = true} : vector<8x1xf32> -> vector<8x1xf32>
    %181 = vector.broadcast %180 : vector<8x1xf32> to vector<8x8xf32>
    %182 = arith.mulf %177, %181 : vector<8x8xf32>
    %183 = arith.truncf %182 : vector<8x8xf32> to vector<8x8xbf16>
    %cst_57 = arith.constant dense<0.000000e+00> : vector<8x8xf32>
    %184 = tpu.matmul %183, %169, %cst_57 {dimension_numbers = #tpu.dot_dimension_numbers<[1], [0], [0], [1], [0, 0, 1, 1], [], []>} : vector<8x8xbf16>, vector<8x8xbf16>, vector<8x8xf32> -> vector<8x8xf32>
    %185 = arith.truncf %184 : vector<8x8xf32> to vector<8x8xbf16>
    %c8_58 = arith.constant 8 : index
    %c16_59 = arith.constant 16 : index
    %186 = vector.load %arg12[%c8_58, %c16_59] : memref<16x32xbf16, #tpu.memory_space<vmem>>, vector<8x8xbf16>
    tpu.vector_store %arg12[%c8_58, %c16_59], %185 {strides = array<i32>} : memref<16x32xbf16, #tpu.memory_space<vmem>>, vector<8x8xbf16>,
    %187 = vector.extract_strided_slice %42 {offsets = [8, 24], sizes = [8, 8], strides = [1, 1]} : vector<16x96xbf16> to vector<8x8xbf16>
    %188 = vector.extract_strided_slice %42 {offsets = [8, 56], sizes = [8, 8], strides = [1, 1]} : vector<16x96xbf16> to vector<8x8xbf16>
    %189 = vector.extract_strided_slice %42 {offsets = [8, 88], sizes = [8, 8], strides = [1, 1]} : vector<16x96xbf16> to vector<8x8xbf16>
    %cst_60 = arith.constant dense<0.000000e+00> : vector<8x8xf32>
    %190 = tpu.matmul %187, %188, %cst_60 {dimension_numbers = #tpu.dot_dimension_numbers<[1], [1], [0], [0], [0, 0, 1, 0], [], []>} : vector<8x8xbf16>, vector<8x8xbf16>, vector<8x8xf32> -> vector<8x8xf32>
    %191 = vector.broadcast %126 : vector<1x8xf32> to vector<8x8xf32>
    %192 = arith.addf %190, %191 : vector<8x8xf32>
    %cst_61 = arith.constant dense<0xFF800000> : vector<8xf32>
    %193 = vector.multi_reduction <maximumf>, %192, %cst_61 [1] : vector<8x8xf32> to vector<8xf32>
    %194 = vector.shape_cast %193 : vector<8xf32> to vector<8x1xf32>
    %195 = vector.broadcast %194 : vector<8x1xf32> to vector<8x8xf32>
    %196 = arith.subf %192, %195 : vector<8x8xf32>
    %197 = math.exp %196 : vector<8x8xf32>
    %cst_62 = arith.constant dense<0.000000e+00> : vector<8xf32>
    %198 = vector.multi_reduction <add>, %197, %cst_62 [1] : vector<8x8xf32> to vector<8xf32>
    %199 = vector.shape_cast %198 : vector<8xf32> to vector<8x1xf32>
    %200 = tpu.reciprocal %199 {approx = true} : vector<8x1xf32> -> vector<8x1xf32>
    %201 = vector.broadcast %200 : vector<8x1xf32> to vector<8x8xf32>
    %202 = arith.mulf %197, %201 : vector<8x8xf32>
    %203 = arith.truncf %202 : vector<8x8xf32> to vector<8x8xbf16>
    %cst_63 = arith.constant dense<0.000000e+00> : vector<8x8xf32>
    %204 = tpu.matmul %203, %189, %cst_63 {dimension_numbers = #tpu.dot_dimension_numbers<[1], [0], [0], [1], [0, 0, 1, 1], [], []>} : vector<8x8xbf16>, vector<8x8xbf16>, vector<8x8xf32> -> vector<8x8xf32>
    %205 = arith.truncf %204 : vector<8x8xf32> to vector<8x8xbf16>
    %c8_64 = arith.constant 8 : index
    %c24_65 = arith.constant 24 : index
    %206 = vector.load %arg12[%c8_64, %c24_65] : memref<16x32xbf16, #tpu.memory_space<vmem>>, vector<8x8xbf16>
    tpu.vector_store %arg12[%c8_64, %c24_65], %205 {strides = array<i32>} : memref<16x32xbf16, #tpu.memory_space<vmem>>, vector<8x8xbf16>,
    %c0_66 = arith.constant 0 : index
    %c0_67 = arith.constant 0 : index
    %207 = vector.load %arg12[%c0_66, %c0_67] : memref<16x32xbf16, #tpu.memory_space<vmem>>, vector<16x32xbf16>
    %c0_68 = arith.constant 0 : index
    %c0_69 = arith.constant 0 : index
    %c0_70 = arith.constant 0 : index
    %208 = vector.load %arg6[%c0_68, %c0_69, %c0_70] : memref<1x32x32xbf16, #tpu.memory_space<vmem>>, vector<1x32x32xbf16>
    %209 = vector.shape_cast %208 : vector<1x32x32xbf16> to vector<32x32xbf16>
    %cst_71 = arith.constant dense<0.000000e+00> : vector<16x32xf32>
    %210 = tpu.matmul %207, %209, %cst_71 {dimension_numbers = #tpu.dot_dimension_numbers<[1], [0], [0], [1], [0, 0, 1, 1], [], []>} : vector<16x32xbf16>, vector<32x32xbf16>, vector<16x32xf32> -> vector<16x32xf32>
    %211 = vector.broadcast %10 : vector<1x32xf32> to vector<16x32xf32>
    %212 = arith.addf %210, %211 : vector<16x32xf32>
    %213 = arith.addf %3, %212 : vector<16x32xf32>
    %cst_72 = arith.constant dense<0.000000e+00> : vector<16xf32>
    %214 = vector.multi_reduction <add>, %213, %cst_72 [1] : vector<16x32xf32> to vector<16xf32>
    %215 = vector.shape_cast %214 : vector<16xf32> to vector<16x1xf32>
    %cst_73 = arith.constant 3.200000e+01 : f32
    %216 = vector.broadcast %cst_73 : f32 to vector<16x1xf32>
    %217 = arith.divf %215, %216 : vector<16x1xf32>
    %218 = vector.broadcast %217 : vector<16x1xf32> to vector<16x32xf32>
    %219 = arith.subf %213, %218 : vector<16x32xf32>
    %220 = arith.mulf %219, %219 : vector<16x32xf32>
    %cst_74 = arith.constant dense<0.000000e+00> : vector<16xf32>
    %221 = vector.multi_reduction <add>, %220, %cst_74 [1] : vector<16x32xf32> to vector<16xf32>
    %222 = vector.shape_cast %221 : vector<16xf32> to vector<16x1xf32>
    %cst_75 = arith.constant 3.200000e+01 : f32
    %223 = vector.broadcast %cst_75 : f32 to vector<16x1xf32>
    %224 = arith.divf %222, %223 : vector<16x1xf32>
    %225 = vector.broadcast %217 : vector<16x1xf32> to vector<16x32xf32>
    %226 = arith.subf %213, %225 : vector<16x32xf32>
    %cst_76 = arith.constant 9.99999974E-6 : f32
    %227 = vector.broadcast %cst_76 : f32 to vector<16x1xf32>
    %228 = arith.addf %224, %227 : vector<16x1xf32>
    %229 = math.rsqrt %228 : vector<16x1xf32>
    %230 = vector.broadcast %229 : vector<16x1xf32> to vector<16x32xf32>
    %231 = arith.mulf %226, %230 : vector<16x32xf32>
    %232 = vector.broadcast %8 : vector<1x32xf32> to vector<16x32xf32>
    %233 = arith.mulf %231, %232 : vector<16x32xf32>
    %234 = vector.broadcast %9 : vector<1x32xf32> to vector<16x32xf32>
    %235 = arith.addf %233, %234 : vector<16x32xf32>
    %236 = arith.truncf %235 : vector<16x32xf32> to vector<16x32xbf16>
    %c0_77 = arith.constant 0 : index
    %c0_78 = arith.constant 0 : index
    %c0_79 = arith.constant 0 : index
    %237 = vector.load %arg8[%c0_77, %c0_78, %c0_79] : memref<1x32x128xbf16, #tpu.memory_space<vmem>>, vector<1x32x128xbf16>
    %238 = vector.shape_cast %237 : vector<1x32x128xbf16> to vector<32x128xbf16>
    %cst_80 = arith.constant dense<0.000000e+00> : vector<16x128xf32>
    %239 = tpu.matmul %236, %238, %cst_80 {dimension_numbers = #tpu.dot_dimension_numbers<[1], [0], [0], [1], [0, 0, 1, 1], [], []>} : vector<16x32xbf16>, vector<32x128xbf16>, vector<16x128xf32> -> vector<16x128xf32>
    %c0_81 = arith.constant 0 : index
    %c0_82 = arith.constant 0 : index
    %c0_83 = arith.constant 0 : index
    %240 = vector.load %arg9[%c0_81, %c0_82, %c0_83] : memref<1x1x128xf32, #tpu.memory_space<vmem>>, vector<1x1x128xf32>
    %241 = vector.shape_cast %240 : vector<1x1x128xf32> to vector<1x128xf32>
    %242 = vector.broadcast %241 : vector<1x128xf32> to vector<16x128xf32>
    %243 = arith.addf %239, %242 : vector<16x128xf32>
    %cst_84 = arith.constant 5.000000e-01 : f32
    %244 = vector.broadcast %cst_84 : f32 to vector<16x128xf32>
    %245 = arith.mulf %244, %243 : vector<16x128xf32>
    %cst_85 = arith.constant 0.707106769 : f32
    %246 = vector.broadcast %cst_85 : f32 to vector<16x128xf32>
    %247 = arith.mulf %243, %246 : vector<16x128xf32>
    %248 = math.erf %247 : vector<16x128xf32>
    %cst_86 = arith.constant 1.000000e+00 : f32
    %249 = vector.broadcast %cst_86 : f32 to vector<16x128xf32>
    %250 = arith.addf %249, %248 : vector<16x128xf32>
    %251 = arith.mulf %245, %250 : vector<16x128xf32>
    %252 = arith.truncf %251 : vector<16x128xf32> to vector<16x128xbf16>
    %c0_87 = arith.constant 0 : index
    %c0_88 = arith.constant 0 : index
    %c0_89 = arith.constant 0 : index
    %253 = vector.load %arg10[%c0_87, %c0_88, %c0_89] : memref<1x128x32xbf16, #tpu.memory_space<vmem>>, vector<1x128x32xbf16>
    %254 = vector.shape_cast %253 : vector<1x128x32xbf16> to vector<128x32xbf16>
    %cst_90 = arith.constant dense<0.000000e+00> : vector<16x32xf32>
    %255 = tpu.matmul %252, %254, %cst_90 {dimension_numbers = #tpu.dot_dimension_numbers<[1], [0], [0], [1], [0, 0, 1, 1], [], []>} : vector<16x128xbf16>, vector<128x32xbf16>, vector<16x32xf32> -> vector<16x32xf32>
    %256 = vector.broadcast %11 : vector<1x32xf32> to vector<16x32xf32>
    %257 = arith.addf %255, %256 : vector<16x32xf32>
    %258 = arith.addf %213, %257 : vector<16x32xf32>
    %c0_91 = arith.constant 0 : index
    %c0_92 = arith.constant 0 : index
    %259 = vector.load %arg11[%c0_91, %c0_92] : memref<16x32xf32, #tpu.memory_space<vmem>>, vector<16x32xf32>
    tpu.vector_store %arg11[%c0_91, %c0_92], %258 {strides = array<i32>} : memref<16x32xf32, #tpu.memory_space<vmem>>, vector<16x32xf32>,
    return
  }
  func.func @transform_0(%arg0: i32, %arg1: i32) -> (i32, i32) {
    %c0_i32 = arith.constant 0 : i32
    %c0_i32_0 = arith.constant 0 : i32
    return %arg0, %c0_i32 : i32, i32
  }
  func.func @transform_1(%arg0: i32, %arg1: i32) -> (i32, i32, i32) {
    %c0_i32 = arith.constant 0 : i32
    %c0_i32_0 = arith.constant 0 : i32
    %c0_i32_1 = arith.constant 0 : i32
    return %arg0, %c0_i32, %c0_i32_0 : i32, i32, i32
  }
  func.func @transform_2(%arg0: i32, %arg1: i32) -> (i32, i32, i32) {
    %c0_i32 = arith.constant 0 : i32
    %c0_i32_0 = arith.constant 0 : i32
    %c0_i32_1 = arith.constant 0 : i32
    return %arg1, %c0_i32, %c0_i32_0 : i32, i32, i32
  }
  func.func @transform_3(%arg0: i32, %arg1: i32) -> (i32, i32, i32) {
    %c0_i32 = arith.constant 0 : i32
    %c0_i32_0 = arith.constant 0 : i32
    %c0_i32_1 = arith.constant 0 : i32
    return %arg1, %c0_i32, %c0_i32_0 : i32, i32, i32
  }
  func.func @transform_4(%arg0: i32, %arg1: i32) -> (i32, i32, i32) {
    %c0_i32 = arith.constant 0 : i32
    %c0_i32_0 = arith.constant 0 : i32
    %c0_i32_1 = arith.constant 0 : i32
    return %arg1, %c0_i32, %c0_i32_0 : i32, i32, i32
  }
  func.func @transform_5(%arg0: i32, %arg1: i32) -> (i32, i32, i32) {
    %c0_i32 = arith.constant 0 : i32
    %c0_i32_0 = arith.constant 0 : i32
    %c0_i32_1 = arith.constant 0 : i32
    return %arg1, %c0_i32, %c0_i32_0 : i32, i32, i32
  }
  func.func @transform_6(%arg0: i32, %arg1: i32) -> (i32, i32, i32) {
    %c0_i32 = arith.constant 0 : i32
    %c0_i32_0 = arith.constant 0 : i32
    %c0_i32_1 = arith.constant 0 : i32
    return %arg1, %c0_i32, %c0_i32_0 : i32, i32, i32
  }
  func.func @transform_7(%arg0: i32, %arg1: i32) -> (i32, i32, i32) {
    %c0_i32 = arith.constant 0 : i32
    %c0_i32_0 = arith.constant 0 : i32
    %c0_i32_1 = arith.constant 0 : i32
    return %arg1, %c0_i32, %c0_i32_0 : i32, i32, i32
  }
  func.func @transform_8(%arg0: i32, %arg1: i32) -> (i32, i32, i32) {
    %c0_i32 = arith.constant 0 : i32
    %c0_i32_0 = arith.constant 0 : i32
    %c0_i32_1 = arith.constant 0 : i32
    return %arg1, %c0_i32, %c0_i32_0 : i32, i32, i32
  }
  func.func @transform_9(%arg0: i32, %arg1: i32) -> (i32, i32) {
    %c0_i32 = arith.constant 0 : i32
    %c0_i32_0 = arith.constant 0 : i32
    return %arg0, %c0_i32 : i32, i32
  }
}

</mosaic_0001>

<llo_original>
// kernel: tpu_custom_call.1
$region0: #{tpu_custom_call.1}
  #allocation0 [shape = 'u32[]', space=smem, size = 0x4, offset = 0x4, fixed_abs, tag = 'smem constant byte address 0x4 - core index']
  #allocation1 [shape = 'u32[144,128]{1,0:T(1,128)}', space=vmem, size = 0x12000, scoped, tag = 'internal scratch']
  #allocation2 [shape = 'bf16[16,32]{1,0:T(16,128)(2,1)}', space=vmem, size = 0x1000, scoped, tag = 'scratch operand']
  %s0 = inlined_call_operand.vmem [shape: f32[16,32], index: 0, kind: input, shape index: {}]
  %s1 = inlined_call_operand.vmem [shape: f32[2,1,8], index: 1, kind: input, shape index: {}]
  %s2 = inlined_call_operand.vmem [shape: bf16[2,32,96], index: 2, kind: input, shape index: {}]
  %s3 = inlined_call_operand.vmem [shape: f32[2,1,96], index: 3, kind: input, shape index: {}]
  %s4 = inlined_call_operand.vmem [shape: bf16[2,32,32], index: 4, kind: input, shape index: {}]
  %s5 = inlined_call_operand.vmem [shape: f32[2,6,32], index: 5, kind: input, shape index: {}]
  %s6 = inlined_call_operand.vmem [shape: bf16[2,32,128], index: 6, kind: input, shape index: {}]
  %s7 = inlined_call_operand.vmem [shape: f32[2,1,128], index: 7, kind: input, shape index: {}]
  %s8 = inlined_call_operand.vmem [shape: bf16[2,128,32], index: 8, kind: input, shape index: {}]
  %s9 = inlined_call_operand.hbm [shape: f32[16,32], index: 9, kind: output, shape index: {}]
  %s10 = sld [smem:[#allocation0]]
  $region73: #{tpu_custom_call.1} parent=0
    _
  %s12 = ssub.s32 1, %s10
  %s13 = scalar_select 0, %s12, %s10
  $region1: #{tpu_custom_call.1} parent=0
    #allocation3 [shape = 'u8[8192]{0}', space=vmem, size = 0x2000, scoped, tag = 'output window, operand 0, single buffered']
    #allocation4 [shape = 's32[2]{0}', space=sflag, size = 0x8, scoped, tag = 'scoped memory for tpu_custom_call.1']
    %14 = vsyncpa [#allocation4], 0
    loop: start=0, step=1, limit=4
    $region2: #{tpu_custom_call.1} parent=1 // loop_pre_header
      _
    $region3: #{tpu_custom_call.1} parent=1 // loop_header
      %s16 = sphi 0, %s20
      %p17 = scmp.ge.s32.totalorder %s16, 4
      %s23 = sphi 0, %s35
      %s24 = sphi 0, %s31
      %s25 = sphi 0, %s23
      %s26 = sphi 0, %s24
      %s27 = sphi 0, %s25
      %s28 = sphi 0, %s26
      %s38 = sphi 0, %s40
      %s41 = sphi 0, %s38
      %s42 = sphi 0, %s41
      %s58 = sphi 0, %s42
      %s64 = sphi 0, %s66
      %s67 = sphi 0, %s64
      %s68 = sphi 0, %s67
      %s84 = sphi 0, %s68
      %s90 = sphi 0, %s92
      %s93 = sphi 0, %s90
      %s94 = sphi 0, %s93
      %s110 = sphi 0, %s94
      %s116 = sphi 0, %s118
      %s119 = sphi 0, %s116
      %s120 = sphi 0, %s119
      %s136 = sphi 0, %s120
      %s142 = sphi 0, %s144
      %s145 = sphi 0, %s142
      %s146 = sphi 0, %s145
      %s162 = sphi 0, %s146
      %s168 = sphi 0, %s170
      %s171 = sphi 0, %s168
      %s172 = sphi 0, %s171
      %s188 = sphi 0, %s172
      %s194 = sphi 0, %s196
      %s197 = sphi 0, %s194
      %s198 = sphi 0, %s197
      %s214 = sphi 0, %s198
      %s220 = sphi 0, %s222
      %s223 = sphi 0, %s220
      %s224 = sphi 0, %s223
      %s240 = sphi 0, %s224
      %s246 = sphi 0, %s248
      %s249 = sphi 0, %s246
      %s250 = sphi 0, %s249
      %s266 = sphi 0, %s250
      %s272 = sphi 0, %s274
      %s275 = sphi 0, %s272
      %s276 = sphi 0, %s275
      %s292 = sphi 0, %s276
    $region4: #{tpu_custom_call.1} parent=1 // loop_header_branch
      %19 = sbr.rel (%p17) target = $region8
    $region5: #{tpu_custom_call.1} parent=1 // loop_body
      %s21 = ssub.s32 %s16, 1
      %s22 = ssub.s32 %s16, 2
      %s29 = sadd.s32 1, %s24
      %p30 = scmp.ge.s32.totalorder %s29, 2
      %s31 = scalar_select %p30, 0, %s29
      %s32 = sadd.s32 1, %s23
      %s33 = scalar_select %p30, %s32, %s23
      %p34 = scmp.ge.s32.totalorder %s33, 1
      %s35 = scalar_select %p34, 0, %s33
      %s36 = ssub.s32 %s23, %s35
      %p37 = scmp.eq.s32.totalorder %s36, 0
      %s39 = sadd.s32 %s38, 1
      %s40 = scalar_select %p37, %s38, %s39
      %p43 = pneg %p37
      %p44 = scmp.eq.s32.totalorder %s16, 1
      %p45 = por %p43, %p44
      %p46 = scmp.ne.s32.totalorder %s38, %s41
      %p47 = scmp.eq.s32.totalorder %s16, 0
      %p48 = por %p46, %p47
      %p49 = scmp.ne.s32.totalorder %s38, %s41
      %p50 = scmp.eq.s32.totalorder %s21, 1
      %p51 = por %p49, %p50
      %p52 = scmp.ne.s32.totalorder %s41, %s42
      %p53 = scmp.eq.s32.totalorder %s21, 0
      %p54 = por %p52, %p53
      %p55 = scmp.ne.s32.totalorder %s41, %s42
      %p56 = scmp.eq.s32.totalorder %s22, 1
      %p57 = por %p55, %p56
      %p59 = scmp.ne.s32.totalorder %s42, %s58
      %p60 = scmp.eq.s32.totalorder %s22, 0
      %p61 = por %p59, %p60
      %s62 = ssub.s32 %s23, %s35
      %p63 = scmp.eq.s32.totalorder %s62, 0
      %s65 = sadd.s32 %s64, 1
      %s66 = scalar_select %p63, %s64, %s65
      %p69 = pneg %p63
      %p70 = scmp.eq.s32.totalorder %s16, 1
      %p71 = por %p69, %p70
      %p72 = scmp.ne.s32.totalorder %s64, %s67
      %p73 = scmp.eq.s32.totalorder %s16, 0
      %p74 = por %p72, %p73
      %p75 = scmp.ne.s32.totalorder %s64, %s67
      %p76 = scmp.eq.s32.totalorder %s21, 1
      %p77 = por %p75, %p76
      %p78 = scmp.ne.s32.totalorder %s67, %s68
      %p79 = scmp.eq.s32.totalorder %s21, 0
      %p80 = por %p78, %p79
      %p81 = scmp.ne.s32.totalorder %s67, %s68
      %p82 = scmp.eq.s32.totalorder %s22, 1
      %p83 = por %p81, %p82
      %p85 = scmp.ne.s32.totalorder %s68, %s84
      %p86 = scmp.eq.s32.totalorder %s22, 0
      %p87 = por %p85, %p86
      %s88 = ssub.s32 %s24, %s31
      %p89 = scmp.eq.s32.totalorder %s88, 0
      %s91 = sadd.s32 %s90, 1
      %s92 = scalar_select %p89, %s90, %s91
      %p95 = pneg %p89
      %p96 = scmp.eq.s32.totalorder %s16, 1
      %p97 = por %p95, %p96
      %p98 = scmp.ne.s32.totalorder %s90, %s93
      %p99 = scmp.eq.s32.totalorder %s16, 0
      %p100 = por %p98, %p99
      %p101 = scmp.ne.s32.totalorder %s90, %s93
      %p102 = scmp.eq.s32.totalorder %s21, 1
      %p103 = por %p101, %p102
      %p104 = scmp.ne.s32.totalorder %s93, %s94
      %p105 = scmp.eq.s32.totalorder %s21, 0
      %p106 = por %p104, %p105
      %p107 = scmp.ne.s32.totalorder %s93, %s94
      %p108 = scmp.eq.s32.totalorder %s22, 1
      %p109 = por %p107, %p108
      %p111 = scmp.ne.s32.totalorder %s94, %s110
      %p112 = scmp.eq.s32.totalorder %s22, 0
      %p113 = por %p111, %p112
      %s114 = ssub.s32 %s24, %s31
      %p115 = scmp.eq.s32.totalorder %s114, 0
      %s117 = sadd.s32 %s116, 1
      %s118 = scalar_select %p115, %s116, %s117
      %p121 = pneg %p115
      %p122 = scmp.eq.s32.totalorder %s16, 1
      %p123 = por %p121, %p122
      %p124 = scmp.ne.s32.totalorder %s116, %s119
      %p125 = scmp.eq.s32.totalorder %s16, 0
      %p126 = por %p124, %p125
      %p127 = scmp.ne.s32.totalorder %s116, %s119
      %p128 = scmp.eq.s32.totalorder %s21, 1
      %p129 = por %p127, %p128
      %p130 = scmp.ne.s32.totalorder %s119, %s120
      %p131 = scmp.eq.s32.totalorder %s21, 0
      %p132 = por %p130, %p131
      %p133 = scmp.ne.s32.totalorder %s119, %s120
      %p134 = scmp.eq.s32.totalorder %s22, 1
      %p135 = por %p133, %p134
      %p137 = scmp.ne.s32.totalorder %s120, %s136
      %p138 = scmp.eq.s32.totalorder %s22, 0
      %p139 = por %p137, %p138
      %s140 = ssub.s32 %s24, %s31
      %p141 = scmp.eq.s32.totalorder %s140, 0
      %s143 = sadd.s32 %s142, 1
      %s144 = scalar_select %p141, %s142, %s143
      %p147 = pneg %p141
      %p148 = scmp.eq.s32.totalorder %s16, 1
      %p149 = por %p147, %p148
      %p150 = scmp.ne.s32.totalorder %s142, %s145
      %p151 = scmp.eq.s32.totalorder %s16, 0
      %p152 = por %p150, %p151
      %p153 = scmp.ne.s32.totalorder %s142, %s145
      %p154 = scmp.eq.s32.totalorder %s21, 1
      %p155 = por %p153, %p154
      %p156 = scmp.ne.s32.totalorder %s145, %s146
      %p157 = scmp.eq.s32.totalorder %s21, 0
      %p158 = por %p156, %p157
      %p159 = scmp.ne.s32.totalorder %s145, %s146
      %p160 = scmp.eq.s32.totalorder %s22, 1
      %p161 = por %p159, %p160
      %p163 = scmp.ne.s32.totalorder %s146, %s162
      %p164 = scmp.eq.s32.totalorder %s22, 0
      %p165 = por %p163, %p164
      %s166 = ssub.s32 %s24, %s31
      %p167 = scmp.eq.s32.totalorder %s166, 0
      %s169 = sadd.s32 %s168, 1
      %s170 = scalar_select %p167, %s168, %s169
      %p173 = pneg %p167
      %p174 = scmp.eq.s32.totalorder %s16, 1
      %p175 = por %p173, %p174
      %p176 = scmp.ne.s32.totalorder %s168, %s171
      %p177 = scmp.eq.s32.totalorder %s16, 0
      %p178 = por %p176, %p177
      %p179 = scmp.ne.s32.totalorder %s168, %s171
      %p180 = scmp.eq.s32.totalorder %s21, 1
      %p181 = por %p179, %p180
      %p182 = scmp.ne.s32.totalorder %s171, %s172
      %p183 = scmp.eq.s32.totalorder %s21, 0
      %p184 = por %p182, %p183
      %p185 = scmp.ne.s32.totalorder %s171, %s172
      %p186 = scmp.eq.s32.totalorder %s22, 1
      %p187 = por %p185, %p186
      %p189 = scmp.ne.s32.totalorder %s172, %s188
      %p190 = scmp.eq.s32.totalorder %s22, 0
      %p191 = por %p189, %p190
      %s192 = ssub.s32 %s24, %s31
      %p193 = scmp.eq.s32.totalorder %s192, 0
      %s195 = sadd.s32 %s194, 1
      %s196 = scalar_select %p193, %s194, %s195
      %p199 = pneg %p193
      %p200 = scmp.eq.s32.totalorder %s16, 1
      %p201 = por %p199, %p200
      %p202 = scmp.ne.s32.totalorder %s194, %s197
      %p203 = scmp.eq.s32.totalorder %s16, 0
      %p204 = por %p202, %p203
      %p205 = scmp.ne.s32.totalorder %s194, %s197
      %p206 = scmp.eq.s32.totalorder %s21, 1
      %p207 = por %p205, %p206
      %p208 = scmp.ne.s32.totalorder %s197, %s198
      %p209 = scmp.eq.s32.totalorder %s21, 0
      %p210 = por %p208, %p209
      %p211 = scmp.ne.s32.totalorder %s197, %s198
      %p212 = scmp.eq.s32.totalorder %s22, 1
      %p213 = por %p211, %p212
      %p215 = scmp.ne.s32.totalorder %s198, %s214
      %p216 = scmp.eq.s32.totalorder %s22, 0
      %p217 = por %p215, %p216
      %s218 = ssub.s32 %s24, %s31
      %p219 = scmp.eq.s32.totalorder %s218, 0
      %s221 = sadd.s32 %s220, 1
      %s222 = scalar_select %p219, %s220, %s221
      %p225 = pneg %p219
      %p226 = scmp.eq.s32.totalorder %s16, 1
      %p227 = por %p225, %p226
      %p228 = scmp.ne.s32.totalorder %s220, %s223
      %p229 = scmp.eq.s32.totalorder %s16, 0
      %p230 = por %p228, %p229
      %p231 = scmp.ne.s32.totalorder %s220, %s223
      %p232 = scmp.eq.s32.totalorder %s21, 1
      %p233 = por %p231, %p232
      %p234 = scmp.ne.s32.totalorder %s223, %s224
      %p235 = scmp.eq.s32.totalorder %s21, 0
      %p236 = por %p234, %p235
      %p237 = scmp.ne.s32.totalorder %s223, %s224
      %p238 = scmp.eq.s32.totalorder %s22, 1
      %p239 = por %p237, %p238
      %p241 = scmp.ne.s32.totalorder %s224, %s240
      %p242 = scmp.eq.s32.totalorder %s22, 0
      %p243 = por %p241, %p242
      %s244 = ssub.s32 %s24, %s31
      %p245 = scmp.eq.s32.totalorder %s244, 0
      %s247 = sadd.s32 %s246, 1
      %s248 = scalar_select %p245, %s246, %s247
      %p251 = pneg %p245
      %p252 = scmp.eq.s32.totalorder %s16, 1
      %p253 = por %p251, %p252
      %p254 = scmp.ne.s32.totalorder %s246, %s249
      %p255 = scmp.eq.s32.totalorder %s16, 0
      %p256 = por %p254, %p255
      %p257 = scmp.ne.s32.totalorder %s246, %s249
      %p258 = scmp.eq.s32.totalorder %s21, 1
      %p259 = por %p257, %p258
      %p260 = scmp.ne.s32.totalorder %s249, %s250
      %p261 = scmp.eq.s32.totalorder %s21, 0
      %p262 = por %p260, %p261
      %p263 = scmp.ne.s32.totalorder %s249, %s250
      %p264 = scmp.eq.s32.totalorder %s22, 1
      %p265 = por %p263, %p264
      %p267 = scmp.ne.s32.totalorder %s250, %s266
      %p268 = scmp.eq.s32.totalorder %s22, 0
      %p269 = por %p267, %p268
      %s270 = ssub.s32 %s23, %s35
      %p271 = scmp.eq.s32.totalorder %s270, 0
      %s273 = sadd.s32 %s272, 1
      %s274 = scalar_select %p271, %s272, %s273
      %p277 = pneg %p271
      %p278 = scmp.eq.s32.totalorder %s16, 1
      %p279 = por %p277, %p278
      %p280 = scmp.ne.s32.totalorder %s272, %s275
      %p281 = scmp.eq.s32.totalorder %s16, 0
      %p282 = por %p280, %p281
      %p283 = scmp.ne.s32.totalorder %s272, %s275
      %p284 = scmp.eq.s32.totalorder %s21, 1
      %p285 = por %p283, %p284
      %p286 = scmp.ne.s32.totalorder %s275, %s276
      %p287 = scmp.eq.s32.totalorder %s21, 0
      %p288 = por %p286, %p287
      %p289 = scmp.ne.s32.totalorder %s275, %s276
      %p290 = scmp.eq.s32.totalorder %s22, 1
      %p291 = por %p289, %p290
      %p293 = scmp.ne.s32.totalorder %s276, %s292
      %p294 = scmp.eq.s32.totalorder %s22, 0
      %p295 = por %p293, %p294
      %p296 = scmp.le.s32.totalorder 1, %s16
      %p297 = scmp.lt.s32.totalorder %s16, 3
      %p298 = pnand %p296, %p297
      %p299 = pneg %p298
      // Predicated region
      $region9: #{tpu_custom_call.1} parent=5 // pred_check
        _
      $region10: #{tpu_custom_call.1} parent=5 // pred_check_branch
        %301 = sbr.rel (%p298) target = $region12
      $region11: #{tpu_custom_call.1} parent=5 // pred_region
        %s302 = ssub.s32 %s16, 1
        // Predicated region
        $region13: #{tpu_custom_call.1} parent=11 // pred_check
          %p303 = pneg %p54
        $region14: #{tpu_custom_call.1} parent=11 // pred_check_branch
          %305 = sbr.rel (%p303) target = $region16
        $region15: #{tpu_custom_call.1} parent=11 // pred_region
          %s306 = smul.u32 2, %s25
          %p307 = scmp.lt.s32.totalorder %s306, 1
          %s308 = scalar_select %p307, %s306, 1
          %s309 = smul.addr %s308, 8
          %s310 = scalar_lea.vmem %s0, %s309
          %s311 = smul.u32 2, %s25
        $region16: #{tpu_custom_call.1} parent=11 // pred_fallthru
          _
        // Predicated region
        $region17: #{tpu_custom_call.1} parent=11 // pred_check
          %p312 = pneg %p80
        $region18: #{tpu_custom_call.1} parent=11 // pred_check_branch
          %314 = sbr.rel (%p312) target = $region20
        $region19: #{tpu_custom_call.1} parent=11 // pred_region
          %s315 = smul.u32 2, %s25
          %p316 = scmp.lt.s32.totalorder %s315, 1
          %s317 = scalar_select %p316, %s315, 1
          %s318 = scalar_lea.vmem %s1, %s317
          %s319 = smul.u32 2, %s25
        $region20: #{tpu_custom_call.1} parent=11 // pred_fallthru
          _
      $region12: #{tpu_custom_call.1} parent=5 // pred_fallthru
        _
      %p320 = scmp.lt.s32.totalorder %s16, 2
      // Predicated region
      $region21: #{tpu_custom_call.1} parent=5 // pred_check
        %p321 = pneg %p320
      $region22: #{tpu_custom_call.1} parent=5 // pred_check_branch
        %323 = sbr.rel (%p321) target = $region24
      $region23: #{tpu_custom_call.1} parent=5 // pred_region
        // Predicated region
        $region25: #{tpu_custom_call.1} parent=23 // pred_check
          %p324 = pneg %p100
        $region26: #{tpu_custom_call.1} parent=23 // pred_check_branch
          %326 = sbr.rel (%p324) target = $region28
        $region27: #{tpu_custom_call.1} parent=23 // pred_region
          %p327 = scmp.lt.s32.totalorder %s24, 1
          %s328 = scalar_select %p327, %s24, 1
          %s329 = smul.addr %s328, 4
          %s330 = smul.addr %s329, 4
          %s331 = scalar_lea.vmem %s2, %s330
        $region28: #{tpu_custom_call.1} parent=23 // pred_fallthru
          _
        // Predicated region
        $region29: #{tpu_custom_call.1} parent=23 // pred_check
          %p332 = pneg %p126
        $region30: #{tpu_custom_call.1} parent=23 // pred_check_branch
          %334 = sbr.rel (%p332) target = $region32
        $region31: #{tpu_custom_call.1} parent=23 // pred_region
          %p335 = scmp.lt.s32.totalorder %s24, 1
          %s336 = scalar_select %p335, %s24, 1
          %s337 = scalar_lea.vmem %s3, %s336
        $region32: #{tpu_custom_call.1} parent=23 // pred_fallthru
          _
        // Predicated region
        $region33: #{tpu_custom_call.1} parent=23 // pred_check
          %p338 = pneg %p152
        $region34: #{tpu_custom_call.1} parent=23 // pred_check_branch
          %340 = sbr.rel (%p338) target = $region36
        $region35: #{tpu_custom_call.1} parent=23 // pred_region
          %p341 = scmp.lt.s32.totalorder %s24, 1
          %s342 = scalar_select %p341, %s24, 1
          %s343 = smul.addr %s342, 4
          %s344 = smul.addr %s343, 4
          %s345 = scalar_lea.vmem %s4, %s344
        $region36: #{tpu_custom_call.1} parent=23 // pred_fallthru
          _
        // Predicated region
        $region37: #{tpu_custom_call.1} parent=23 // pred_check
          %p346 = pneg %p178
        $region38: #{tpu_custom_call.1} parent=23 // pred_check_branch
          %348 = sbr.rel (%p346) target = $region40
        $region39: #{tpu_custom_call.1} parent=23 // pred_region
          %p349 = scmp.lt.s32.totalorder %s24, 1
          %s350 = scalar_select %p349, %s24, 1
          %s351 = smul.addr %s350, 8
          %s352 = scalar_lea.vmem %s5, %s351
        $region40: #{tpu_custom_call.1} parent=23 // pred_fallthru
          _
        // Predicated region
        $region41: #{tpu_custom_call.1} parent=23 // pred_check
          %p353 = pneg %p204
        $region42: #{tpu_custom_call.1} parent=23 // pred_check_branch
          %355 = sbr.rel (%p353) target = $region44
        $region43: #{tpu_custom_call.1} parent=23 // pred_region
          %p356 = scmp.lt.s32.totalorder %s24, 1
          %s357 = scalar_select %p356, %s24, 1
          %s358 = smul.addr %s357, 4
          %s359 = smul.addr %s358, 4
          %s360 = scalar_lea.vmem %s6, %s359
        $region44: #{tpu_custom_call.1} parent=23 // pred_fallthru
          _
        // Predicated region
        $region45: #{tpu_custom_call.1} parent=23 // pred_check
          %p361 = pneg %p230
        $region46: #{tpu_custom_call.1} parent=23 // pred_check_branch
          %363 = sbr.rel (%p361) target = $region48
        $region47: #{tpu_custom_call.1} parent=23 // pred_region
          %p364 = scmp.lt.s32.totalorder %s24, 1
          %s365 = scalar_select %p364, %s24, 1
          %s366 = scalar_lea.vmem %s7, %s365
        $region48: #{tpu_custom_call.1} parent=23 // pred_fallthru
          _
        // Predicated region
        $region49: #{tpu_custom_call.1} parent=23 // pred_check
          %p367 = pneg %p256
        $region50: #{tpu_custom_call.1} parent=23 // pred_check_branch
          %369 = sbr.rel (%p367) target = $region52
        $region51: #{tpu_custom_call.1} parent=23 // pred_region
          %p370 = scmp.lt.s32.totalorder %s24, 1
          %s371 = scalar_select %p370, %s24, 1
          %s372 = smul.addr %s371, 16
          %s373 = smul.addr %s372, 4
          %s374 = scalar_lea.vmem %s8, %s373
        $region52: #{tpu_custom_call.1} parent=23 // pred_fallthru
          _
      $region24: #{tpu_custom_call.1} parent=5 // pred_fallthru
        _
      %p375 = scmp.le.s32.totalorder 1, %s16
      %p376 = scmp.lt.s32.totalorder %s16, 3
      %p377 = pnand %p375, %p376
      %p378 = pneg %p377
      // Predicated region
      $region53: #{tpu_custom_call.1} parent=5 // pred_check
        _
      $region54: #{tpu_custom_call.1} parent=5 // pred_check_branch
        %380 = sbr.rel (%p377) target = $region56
      $region55: #{tpu_custom_call.1} parent=5 // pred_region
        %s381 = ssub.s32 %s16, 1
        %s382 = smul.u32 2, %s25
        %p383 = scmp.lt.s32.totalorder %s382, 1
        %s384 = scalar_select %p383, %s382, 1
        %s385 = smul.addr %s384, 8
        %s386 = scalar_lea.vmem %s0, %s385
        %p387 = pneg %p54
        %p388 = pneg %p51
        %s389 = smul.u32 2, %s25
        %p390 = scmp.lt.s32.totalorder %s389, 1
        %s391 = scalar_select %p390, %s389, 1
        %s392 = scalar_lea.vmem %s1, %s391
        %p393 = pneg %p80
        %p394 = pneg %p77
        %p395 = scmp.lt.s32.totalorder %s26, 1
        %s396 = scalar_select %p395, %s26, 1
        %s397 = smul.addr %s396, 4
        %s398 = smul.addr %s397, 4
        %s399 = scalar_lea.vmem %s2, %s398
        %p400 = pneg %p106
        %p401 = pneg %p103
        %p402 = scmp.lt.s32.totalorder %s26, 1
        %s403 = scalar_select %p402, %s26, 1
        %s404 = scalar_lea.vmem %s3, %s403
        %p405 = pneg %p132
        %p406 = pneg %p129
        %p407 = scmp.lt.s32.totalorder %s26, 1
        %s408 = scalar_select %p407, %s26, 1
        %s409 = smul.addr %s408, 4
        %s410 = smul.addr %s409, 4
        %s411 = scalar_lea.vmem %s4, %s410
        %p412 = pneg %p158
        %p413 = pneg %p155
        %p414 = scmp.lt.s32.totalorder %s26, 1
        %s415 = scalar_select %p414, %s26, 1
        %s416 = smul.addr %s415, 8
        %s417 = scalar_lea.vmem %s5, %s416
        %p418 = pneg %p184
        %p419 = pneg %p181
        %p420 = scmp.lt.s32.totalorder %s26, 1
        %s421 = scalar_select %p420, %s26, 1
        %s422 = smul.addr %s421, 4
        %s423 = smul.addr %s422, 4
        %s424 = scalar_lea.vmem %s6, %s423
        %p425 = pneg %p210
        %p426 = pneg %p207
        %p427 = scmp.lt.s32.totalorder %s26, 1
        %s428 = scalar_select %p427, %s26, 1
        %s429 = scalar_lea.vmem %s7, %s428
        %p430 = pneg %p236
        %p431 = pneg %p233
        %p432 = scmp.lt.s32.totalorder %s26, 1
        %s433 = scalar_select %p432, %s26, 1
        %s434 = smul.addr %s433, 16
        %s435 = smul.addr %s434, 4
        %s436 = scalar_lea.vmem %s8, %s435
        %p437 = pneg %p262
        %p438 = pneg %p259
        %p439 = pneg %p288
        %p440 = pneg %p285
        %s441 = smul.u32 2, %s25
        %p442 = scmp.lt.s32.totalorder %s441, 1
        %s443 = scalar_select %p442, %s441, 1
        %s444 = smul.addr %s443, 8
        %s445 = scalar_lea.vmem %s0, %s444
        %s446 = smul.u32 2, %s25
        %s447 = smul.u32 2, %s25
        %p448 = scmp.lt.s32.totalorder %s447, 1
        %s449 = scalar_select %p448, %s447, 1
        %s450 = scalar_lea.vmem %s1, %s449
        %s451 = smul.u32 2, %s25
        %p452 = scmp.lt.s32.totalorder %s26, 1
        %s453 = scalar_select %p452, %s26, 1
        %s454 = smul.addr %s453, 4
        %s455 = smul.addr %s454, 4
        %s456 = scalar_lea.vmem %s2, %s455
        %p457 = scmp.lt.s32.totalorder %s26, 1
        %s458 = scalar_select %p457, %s26, 1
        %s459 = scalar_lea.vmem %s3, %s458
        %p460 = scmp.lt.s32.totalorder %s26, 1
        %s461 = scalar_select %p460, %s26, 1
        %s462 = smul.addr %s461, 4
        %s463 = smul.addr %s462, 4
        %s464 = scalar_lea.vmem %s4, %s463
        %p465 = scmp.lt.s32.totalorder %s26, 1
        %s466 = scalar_select %p465, %s26, 1
        %s467 = smul.addr %s466, 8
        %s468 = scalar_lea.vmem %s5, %s467
        %p469 = scmp.lt.s32.totalorder %s26, 1
        %s470 = scalar_select %p469, %s26, 1
        %s471 = smul.addr %s470, 4
        %s472 = smul.addr %s471, 4
        %s473 = scalar_lea.vmem %s6, %s472
        %p474 = scmp.lt.s32.totalorder %s26, 1
        %s475 = scalar_select %p474, %s26, 1
        %s476 = scalar_lea.vmem %s7, %s475
        %p477 = scmp.lt.s32.totalorder %s26, 1
        %s478 = scalar_select %p477, %s26, 1
        %s479 = smul.addr %s478, 16
        %s480 = smul.addr %s479, 4
        %s481 = scalar_lea.vmem %s8, %s480
        %s482 = smul.u32 2, %s25
        %p484 = scmp.eq.s32.totalorder %s26, 0
        // Predicated region
        $region57: #{tpu_custom_call.1} parent=55 // pred_check
          %p485 = pneg %p484
        $region58: #{tpu_custom_call.1} parent=55 // pred_check_branch
          %487 = sbr.rel (%p485) target = $region60
        $region59: #{tpu_custom_call.1} parent=55 // pred_region
          %v488 = vld [vmem:[%s445] sm:$0xff]
          %v489 = vld [vmem:[%s445 + $0x8] sm:$0xff]
          %vm490 = vcmask 261120
          %491 = vst.msk [vmem:[#allocation3] sm:$0xff] %vm490, %v488
          %492 = vst.msk [vmem:[#allocation3 + $0x8] sm:$0xff] %vm490, %v489
        $region60: #{tpu_custom_call.1} parent=55 // pred_fallthru
          _
        %v493 = vld [vmem:[#allocation3] sm:$0xff]
        %v494 = vld [vmem:[#allocation3 + $0x8] sm:$0xff]
        %v495 = vld [vmem:[%s468] sm:$0x3f]
        %vm496 = vcmask 261120
        %v497 = vsel %vm496, %v493, 0.0
        %498 = vadd.xlane.f32.xlu0 %v497
        %v499 = vpop.xlane.xlu0 %498
        %v500 = vsel %vm496, %v494, 0.0
        %501 = vadd.xlane.f32.xlu0 %v500
        %v502 = vpop.xlane.xlu0 %501
        %v503 = vrcp.pop 32.0
        %v504 = vmul.f32 %v499, %v503
        %v505 = vmul.f32 %v502, %v503
        %v506 = vsub.f32 %v493, %v504
        %v507 = vsub.f32 %v494, %v505
        %v508 = vmul.f32 %v506, %v506
        %v509 = vmul.f32 %v507, %v507
        %v510 = vsel %vm496, %v508, 0.0
        %511 = vadd.xlane.f32.xlu0 %v510
        %v512 = vpop.xlane.xlu0 %511
        %v513 = vsel %vm496, %v509, 0.0
        %514 = vadd.xlane.f32.xlu0 %v513
        %v515 = vpop.xlane.xlu0 %514
        %v516 = vmul.f32 %v512, %v503
        %v517 = vmul.f32 %v515, %v503
        %v518 = vadd.f32 %v516, 1e-05
        %v519 = vadd.f32 %v517, 1e-05
        %v520 = vrsqrt.pop %v518
        %v521 = vrsqrt.pop %v519
        %v522 = vmul.f32 %v506, %v520
        %v523 = vmul.f32 %v507, %v521
        %v524 = vlaneseq
        %v525 = vshrl.u32 %v524, 7
        %v526 = vsub.s32 0, %v525
        %v527 = vrot.slane %v495, %v526
        %v528 = vmul.f32 %v522, %v527
        %v529 = vmul.f32 %v523, %v527
        %v530 = vlaneseq
        %v531 = vshrl.u32 %v530, 7
        %v532 = vsub.s32 1, %v531
        %v533 = vrot.slane %v495, %v532
        %v534 = vadd.f32 %v528, %v533
        %v535 = vadd.f32 %v529, %v533
        %v536 = vpack.c.bf16 %v535, %v534
        %v537 = vld [vmem:[%s456] sm:$0xf]
        %v538 = vld [vmem:[%s456 + $0x4] sm:$0xf]
        %v539 = vld [vmem:[%s456 + $0x8] sm:$0xf]
        %v540 = vld [vmem:[%s456 + $0xc] sm:$0xf]
        %v541 = vld [vmem:[%s459] sm:$0x1]
        %v543 = vlaneseq
        %v544 = vshrl.u32 %v543, 7
        %v545 = vsub.s32 0, %v544
        %v546 = vrot.slane %v541, %v545
        %v552 = vunpack.c.l.b16 %v537
        %v553 = vunpack.c.l.b16 %v538
        %v554 = vunpack.c.l.b16 %v539
        %v555 = vunpack.c.l.b16 %v540
        %v556 = vpack.c.b16 %v553, %v552
        %v557 = vpack.c.b16 %v555, %v554
        %v561 = vsel %vm496, %v536, 0
        %563 = vmatprep.subr.bf16.mxu0 0
        %564 = vmatpush1.bf16.msra.mxu0 %v556
        %565 = vmatprep.subr.bf16.mxu0 0
        %566 = vmatpush1.bf16.msra.mxu0 %v557
        %567 = vmatprep.subr.bf16.mxu0 0
        %568 = vmatpush1.bf16.msra.mxu0 0
        %569 = vmatprep.subr.bf16.mxu0 0
        %570 = vmatpush1.bf16.msra.mxu0 0
        %571 = vmatprep.subr.bf16.mxu0 0
        %572 = vmatpush1.bf16.msra.mxu0 0
        %573 = vmatprep.subr.bf16.mxu0 0
        %574 = vmatpush1.bf16.msra.mxu0 0
        %575 = vmatprep.subr.bf16.mxu0 0
        %576 = vmatpush1.bf16.msra.mxu0 0
        %577 = vmatprep.subr.bf16.mxu0 0
        %578 = vmatpush1.bf16.msra.mxu0 0
        %579 = vmatprep.subr.bf16.mxu0 0
        %580 = vmatpush1.bf16.msra.mxu0 0
        %581 = vmatprep.subr.bf16.mxu0 0
        %582 = vmatpush1.bf16.msra.mxu0 0
        %583 = vmatprep.subr.bf16.mxu0 0
        %584 = vmatpush1.bf16.msra.mxu0 0
        %585 = vmatprep.subr.bf16.mxu0 0
        %586 = vmatpush1.bf16.msra.mxu0 0
        %587 = vmatprep.subr.bf16.mxu0 0
        %588 = vmatpush1.bf16.msra.mxu0 0
        %589 = vmatprep.subr.bf16.mxu0 0
        %590 = vmatpush1.bf16.msra.mxu0 0
        %591 = vmatprep.subr.bf16.mxu0 0
        %592 = vmatpush1.bf16.msra.mxu0 0
        %593 = vmatprep.subr.bf16.mxu0 0
        %594 = vmatpush1.bf16.msra.mxu0 0
        %595 = vmatprep.mubr.bf16.mxu0 0
        %596 = vmatmul.mubr.bf16.gmra.mrb[0].mxu0 %v561
        %v597 = vpop.f32.mrb[0].mxu0
        %v598 = vadd.f32 %v546, %v597
        %v599 = vpop.f32.mrb[0].mxu0
        %v600 = vpop.f32.mrb[0].mxu0
        %v601 = vadd.f32 %v546, %v600
        %v602 = vpop.f32.mrb[0].mxu0
        %603 = vdwg.mxu0
        %v604 = vpack.c.bf16 %v601, %v598
        %v605 = vld [vmem:[%s450] sm:$0x1]
        %v607 = vlaneseq
        %v608 = vshrl.u32 %v607, 7
        %v609 = vsub.s32 0, %v608
        %v610 = vrot.slane %v605, %v609
        %613 = vrot.lane.b32.xlu0 %v604, 96
        %v614 = vpop.permute.xlu0 %613
        %vm615 = vcmask 64512
        %v617 = vsel %vm615, %v604, 0
        %v620 = vsel %vm615, %v614, 0
        %622 = vmatprep.subr.bf16.mxu0 0
        %623 = vmatpush1.bf16.xpose.msra.mxu0 %v620
        %624 = vmatprep.subr.bf16.mxu0 0
        %625 = vmatpush1.bf16.xpose.msra.mxu0 0
        %626 = vmatprep.subr.bf16.mxu0 0
        %627 = vmatpush1.bf16.xpose.msra.mxu0 0
        %628 = vmatprep.subr.bf16.mxu0 0
        %629 = vmatpush1.bf16.xpose.msra.mxu0 0
        %630 = vmatprep.subr.bf16.mxu0 0
        %631 = vmatpush1.bf16.xpose.msra.mxu0 0
        %632 = vmatprep.subr.bf16.mxu0 0
        %633 = vmatpush1.bf16.xpose.msra.mxu0 0
        %634 = vmatprep.subr.bf16.mxu0 0
        %635 = vmatpush1.bf16.xpose.msra.mxu0 0
        %636 = vmatprep.subr.bf16.mxu0 0
        %637 = vmatpush1.bf16.xpose.msra.mxu0 0
        %638 = vmatprep.subr.bf16.mxu0 0
        %639 = vmatpush1.bf16.xpose.msra.mxu0 0
        %640 = vmatprep.subr.bf16.mxu0 0
        %641 = vmatpush1.bf16.xpose.msra.mxu0 0
        %642 = vmatprep.subr.bf16.mxu0 0
        %643 = vmatpush1.bf16.xpose.msra.mxu0 0
        %644 = vmatprep.subr.bf16.mxu0 0
        %645 = vmatpush1.bf16.xpose.msra.mxu0 0
        %646 = vmatprep.subr.bf16.mxu0 0
        %647 = vmatpush1.bf16.xpose.msra.mxu0 0
        %648 = vmatprep.subr.bf16.mxu0 0
        %649 = vmatpush1.bf16.xpose.msra.mxu0 0
        %650 = vmatprep.subr.bf16.mxu0 0
        %651 = vmatpush1.bf16.xpose.msra.mxu0 0
        %652 = vmatprep.subr.bf16.mxu0 0
        %653 = vmatpush1.bf16.xpose.msra.mxu0 0
        %654 = vmatprep.mubr.bf16.mxu0 0
        %655 = vmatmul.mubr.bf16.gmra.mrb[0].mxu0 %v617
        %v656 = vpop.f32.mrb[0].mxu0
        %v657 = vadd.f32 %v610, %v656
        %v658 = vpop.f32.mrb[0].mxu0
        %v659 = vpop.f32.mrb[0].mxu0
        %v660 = vpop.f32.mrb[0].mxu0
        %661 = vdwg.mxu0
        %v662 = vsel %vm615, %v657, -inf
        %663 = vmax.xlane.f32.xlu0 %v662
        %v664 = vpop.xlane.xlu0 %663
        %v665 = vsub.f32 %v657, %v664
        %v666 = vmul.f32 %v665, 1.442695
        %v667 = vpow.pop %v666
        %v668 = vsel %vm615, %v667, 0.0
        %669 = vadd.xlane.f32.xlu0 %v668
        %v670 = vpop.xlane.xlu0 %669
        %v671 = vrcp.pop %v670
        %v672 = vmul.f32 %v667, %v671
        %v673 = vpack.c.bf16 %v672, %v672
        %674 = vrot.lane.b32.xlu0 %v604, 64
        %v675 = vpop.permute.xlu0 %674
        %v677 = vsel %vm615, %v673, 0
        %vm679 = vcmask 1043456
        %v681 = vsel %vm679, %v675, 0
        %683 = vmatprep.subr.bf16.mxu0 0
        %684 = vmatpush1.bf16.msra.mxu0 %v681
        %685 = vmatprep.subr.bf16.mxu0 0
        %686 = vmatpush1.bf16.msra.mxu0 0
        %687 = vmatprep.subr.bf16.mxu0 0
        %688 = vmatpush1.bf16.msra.mxu0 0
        %689 = vmatprep.subr.bf16.mxu0 0
        %690 = vmatpush1.bf16.msra.mxu0 0
        %691 = vmatprep.subr.bf16.mxu0 0
        %692 = vmatpush1.bf16.msra.mxu0 0
        %693 = vmatprep.subr.bf16.mxu0 0
        %694 = vmatpush1.bf16.msra.mxu0 0
        %695 = vmatprep.subr.bf16.mxu0 0
        %696 = vmatpush1.bf16.msra.mxu0 0
        %697 = vmatprep.subr.bf16.mxu0 0
        %698 = vmatpush1.bf16.msra.mxu0 0
        %699 = vmatprep.subr.bf16.mxu0 0
        %700 = vmatpush1.bf16.msra.mxu0 0
        %701 = vmatprep.subr.bf16.mxu0 0
        %702 = vmatpush1.bf16.msra.mxu0 0
        %703 = vmatprep.subr.bf16.mxu0 0
        %704 = vmatpush1.bf16.msra.mxu0 0
        %705 = vmatprep.subr.bf16.mxu0 0
        %706 = vmatpush1.bf16.msra.mxu0 0
        %707 = vmatprep.subr.bf16.mxu0 0
        %708 = vmatpush1.bf16.msra.mxu0 0
        %709 = vmatprep.subr.bf16.mxu0 0
        %710 = vmatpush1.bf16.msra.mxu0 0
        %711 = vmatprep.subr.bf16.mxu0 0
        %712 = vmatpush1.bf16.msra.mxu0 0
        %713 = vmatprep.subr.bf16.mxu0 0
        %714 = vmatpush1.bf16.msra.mxu0 0
        %715 = vmatprep.mubr.bf16.mxu0 0
        %716 = vmatmul.mubr.bf16.gmra.mrb[0].mxu0 %v677
        %v717 = vpop.f32.mrb[0].mxu0
        %v718 = vadd.f32 0.0, %v717
        %v719 = vpop.f32.mrb[0].mxu0
        %v720 = vpop.f32.mrb[0].mxu0
        %v721 = vpop.f32.mrb[0].mxu0
        %722 = vdwg.mxu0
        %v723 = vpack.c.bf16 %v718, %v718
        %vm724 = vcmask 60416
        %725 = vst.msk [vmem:[#allocation2] sm:$0xf] %vm724, %v723
        %726 = vrot.lane.b32.xlu0 %v604, 120
        %v727 = vpop.permute.xlu0 %726
        %728 = vrot.lane.b32.xlu0 %v604, 88
        %v729 = vpop.permute.xlu0 %728
        %v731 = vsel %vm615, %v727, 0
        %v734 = vsel %vm615, %v729, 0
        %736 = vmatprep.subr.bf16.mxu0 0
        %737 = vmatpush1.bf16.xpose.msra.mxu0 %v734
        %738 = vmatprep.subr.bf16.mxu0 0
        %739 = vmatpush1.bf16.xpose.msra.mxu0 0
        %740 = vmatprep.subr.bf16.mxu0 0
        %741 = vmatpush1.bf16.xpose.msra.mxu0 0
        %742 = vmatprep.subr.bf16.mxu0 0
        %743 = vmatpush1.bf16.xpose.msra.mxu0 0
        %744 = vmatprep.subr.bf16.mxu0 0
        %745 = vmatpush1.bf16.xpose.msra.mxu0 0
        %746 = vmatprep.subr.bf16.mxu0 0
        %747 = vmatpush1.bf16.xpose.msra.mxu0 0
        %748 = vmatprep.subr.bf16.mxu0 0
        %749 = vmatpush1.bf16.xpose.msra.mxu0 0
        %750 = vmatprep.subr.bf16.mxu0 0
        %751 = vmatpush1.bf16.xpose.msra.mxu0 0
        %752 = vmatprep.subr.bf16.mxu0 0
        %753 = vmatpush1.bf16.xpose.msra.mxu0 0
        %754 = vmatprep.subr.bf16.mxu0 0
        %755 = vmatpush1.bf16.xpose.msra.mxu0 0
        %756 = vmatprep.subr.bf16.mxu0 0
        %757 = vmatpush1.bf16.xpose.msra.mxu0 0
        %758 = vmatprep.subr.bf16.mxu0 0
        %759 = vmatpush1.bf16.xpose.msra.mxu0 0
        %760 = vmatprep.subr.bf16.mxu0 0
        %761 = vmatpush1.bf16.xpose.msra.mxu0 0
        %762 = vmatprep.subr.bf16.mxu0 0
        %763 = vmatpush1.bf16.xpose.msra.mxu0 0
        %764 = vmatprep.subr.bf16.mxu0 0
        %765 = vmatpush1.bf16.xpose.msra.mxu0 0
        %766 = vmatprep.subr.bf16.mxu0 0
        %767 = vmatpush1.bf16.xpose.msra.mxu0 0
        %768 = vmatprep.mubr.bf16.mxu0 0
        %769 = vmatmul.mubr.bf16.gmra.mrb[0].mxu0 %v731
        %v770 = vpop.f32.mrb[0].mxu0
        %v771 = vadd.f32 %v610, %v770
        %v772 = vpop.f32.mrb[0].mxu0
        %v773 = vpop.f32.mrb[0].mxu0
        %v774 = vpop.f32.mrb[0].mxu0
        %775 = vdwg.mxu0
        %v776 = vsel %vm615, %v771, -inf
        %777 = vmax.xlane.f32.xlu0 %v776
        %v778 = vpop.xlane.xlu0 %777
        %v779 = vsub.f32 %v771, %v778
        %v780 = vmul.f32 %v779, 1.442695
        %v781 = vpow.pop %v780
        %v782 = vsel %vm615, %v781, 0.0
        %783 = vadd.xlane.f32.xlu0 %v782
        %v784 = vpop.xlane.xlu0 %783
        %v785 = vrcp.pop %v784
        %v786 = vmul.f32 %v781, %v785
        %v787 = vpack.c.bf16 %v786, %v786
        %788 = vrot.lane.b32.xlu0 %v604, 56
        %v789 = vpop.permute.xlu0 %788
        %v791 = vsel %vm615, %v787, 0
        %v794 = vsel %vm679, %v789, 0
        %796 = vmatprep.subr.bf16.mxu0 0
        %797 = vmatpush1.bf16.msra.mxu0 %v794
        %798 = vmatprep.subr.bf16.mxu0 0
        %799 = vmatpush1.bf16.msra.mxu0 0
        %800 = vmatprep.subr.bf16.mxu0 0
        %801 = vmatpush1.bf16.msra.mxu0 0
        %802 = vmatprep.subr.bf16.mxu0 0
        %803 = vmatpush1.bf16.msra.mxu0 0
        %804 = vmatprep.subr.bf16.mxu0 0
        %805 = vmatpush1.bf16.msra.mxu0 0
        %806 = vmatprep.subr.bf16.mxu0 0
        %807 = vmatpush1.bf16.msra.mxu0 0
        %808 = vmatprep.subr.bf16.mxu0 0
        %809 = vmatpush1.bf16.msra.mxu0 0
        %810 = vmatprep.subr.bf16.mxu0 0
        %811 = vmatpush1.bf16.msra.mxu0 0
        %812 = vmatprep.subr.bf16.mxu0 0
        %813 = vmatpush1.bf16.msra.mxu0 0
        %814 = vmatprep.subr.bf16.mxu0 0
        %815 = vmatpush1.bf16.msra.mxu0 0
        %816 = vmatprep.subr.bf16.mxu0 0
        %817 = vmatpush1.bf16.msra.mxu0 0
        %818 = vmatprep.subr.bf16.mxu0 0
        %819 = vmatpush1.bf16.msra.mxu0 0
        %820 = vmatprep.subr.bf16.mxu0 0
        %821 = vmatpush1.bf16.msra.mxu0 0
        %822 = vmatprep.subr.bf16.mxu0 0
        %823 = vmatpush1.bf16.msra.mxu0 0
        %824 = vmatprep.subr.bf16.mxu0 0
        %825 = vmatpush1.bf16.msra.mxu0 0
        %826 = vmatprep.subr.bf16.mxu0 0
        %827 = vmatpush1.bf16.msra.mxu0 0
        %828 = vmatprep.mubr.bf16.mxu0 0
        %829 = vmatmul.mubr.bf16.gmra.mrb[0].mxu0 %v791
        %v830 = vpop.f32.mrb[0].mxu0
        %v831 = vadd.f32 0.0, %v830
        %v832 = vpop.f32.mrb[0].mxu0
        %v833 = vpop.f32.mrb[0].mxu0
        %v834 = vpop.f32.mrb[0].mxu0
        %835 = vdwg.mxu0
        %v836 = vpack.c.bf16 %v831, %v831
        %838 = vrot.lane.b32.xlu0 %v836, 8
        %v839 = vpop.permute.xlu0 %838
        %vm841 = vcmask 126016
        %842 = vst.msk [vmem:[#allocation2] sm:$0xf] %vm841, %v839
        %843 = vrot.lane.b32.xlu0 %v604, 112
        %v844 = vpop.permute.xlu0 %843
        %845 = vrot.lane.b32.xlu0 %v604, 80
        %v846 = vpop.permute.xlu0 %845
        %v848 = vsel %vm615, %v844, 0
        %v851 = vsel %vm615, %v846, 0
        %853 = vmatprep.subr.bf16.mxu0 0
        %854 = vmatpush1.bf16.xpose.msra.mxu0 %v851
        %855 = vmatprep.subr.bf16.mxu0 0
        %856 = vmatpush1.bf16.xpose.msra.mxu0 0
        %857 = vmatprep.subr.bf16.mxu0 0
        %858 = vmatpush1.bf16.xpose.msra.mxu0 0
        %859 = vmatprep.subr.bf16.mxu0 0
        %860 = vmatpush1.bf16.xpose.msra.mxu0 0
        %861 = vmatprep.subr.bf16.mxu0 0
        %862 = vmatpush1.bf16.xpose.msra.mxu0 0
        %863 = vmatprep.subr.bf16.mxu0 0
        %864 = vmatpush1.bf16.xpose.msra.mxu0 0
        %865 = vmatprep.subr.bf16.mxu0 0
        %866 = vmatpush1.bf16.xpose.msra.mxu0 0
        %867 = vmatprep.subr.bf16.mxu0 0
        %868 = vmatpush1.bf16.xpose.msra.mxu0 0
        %869 = vmatprep.subr.bf16.mxu0 0
        %870 = vmatpush1.bf16.xpose.msra.mxu0 0
        %871 = vmatprep.subr.bf16.mxu0 0
        %872 = vmatpush1.bf16.xpose.msra.mxu0 0
        %873 = vmatprep.subr.bf16.mxu0 0
        %874 = vmatpush1.bf16.xpose.msra.mxu0 0
        %875 = vmatprep.subr.bf16.mxu0 0
        %876 = vmatpush1.bf16.xpose.msra.mxu0 0
        %877 = vmatprep.subr.bf16.mxu0 0
        %878 = vmatpush1.bf16.xpose.msra.mxu0 0
        %879 = vmatprep.subr.bf16.mxu0 0
        %880 = vmatpush1.bf16.xpose.msra.mxu0 0
        %881 = vmatprep.subr.bf16.mxu0 0
        %882 = vmatpush1.bf16.xpose.msra.mxu0 0
        %883 = vmatprep.subr.bf16.mxu0 0
        %884 = vmatpush1.bf16.xpose.msra.mxu0 0
        %885 = vmatprep.mubr.bf16.mxu0 0
        %886 = vmatmul.mubr.bf16.gmra.mrb[0].mxu0 %v848
        %v887 = vpop.f32.mrb[0].mxu0
        %v888 = vadd.f32 %v610, %v887
        %v889 = vpop.f32.mrb[0].mxu0
        %v890 = vpop.f32.mrb[0].mxu0
        %v891 = vpop.f32.mrb[0].mxu0
        %892 = vdwg.mxu0
        %v893 = vsel %vm615, %v888, -inf
        %894 = vmax.xlane.f32.xlu0 %v893
        %v895 = vpop.xlane.xlu0 %894
        %v896 = vsub.f32 %v888, %v895
        %v897 = vmul.f32 %v896, 1.442695
        %v898 = vpow.pop %v897
        %v899 = vsel %vm615, %v898, 0.0
        %900 = vadd.xlane.f32.xlu0 %v899
        %v901 = vpop.xlane.xlu0 %900
        %v902 = vrcp.pop %v901
        %v903 = vmul.f32 %v898, %v902
        %v904 = vpack.c.bf16 %v903, %v903
        %905 = vrot.lane.b32.xlu0 %v604, 48
        %v906 = vpop.permute.xlu0 %905
        %v908 = vsel %vm615, %v904, 0
        %v911 = vsel %vm679, %v906, 0
        %913 = vmatprep.subr.bf16.mxu0 0
        %914 = vmatpush1.bf16.msra.mxu0 %v911
        %915 = vmatprep.subr.bf16.mxu0 0
        %916 = vmatpush1.bf16.msra.mxu0 0
        %917 = vmatprep.subr.bf16.mxu0 0
        %918 = vmatpush1.bf16.msra.mxu0 0
        %919 = vmatprep.subr.bf16.mxu0 0
        %920 = vmatpush1.bf16.msra.mxu0 0
        %921 = vmatprep.subr.bf16.mxu0 0
        %922 = vmatpush1.bf16.msra.mxu0 0
        %923 = vmatprep.subr.bf16.mxu0 0
        %924 = vmatpush1.bf16.msra.mxu0 0
        %925 = vmatprep.subr.bf16.mxu0 0
        %926 = vmatpush1.bf16.msra.mxu0 0
        %927 = vmatprep.subr.bf16.mxu0 0
        %928 = vmatpush1.bf16.msra.mxu0 0
        %929 = vmatprep.subr.bf16.mxu0 0
        %930 = vmatpush1.bf16.msra.mxu0 0
        %931 = vmatprep.subr.bf16.mxu0 0
        %932 = vmatpush1.bf16.msra.mxu0 0
        %933 = vmatprep.subr.bf16.mxu0 0
        %934 = vmatpush1.bf16.msra.mxu0 0
        %935 = vmatprep.subr.bf16.mxu0 0
        %936 = vmatpush1.bf16.msra.mxu0 0
        %937 = vmatprep.subr.bf16.mxu0 0
        %938 = vmatpush1.bf16.msra.mxu0 0
        %939 = vmatprep.subr.bf16.mxu0 0
        %940 = vmatpush1.bf16.msra.mxu0 0
        %941 = vmatprep.subr.bf16.mxu0 0
        %942 = vmatpush1.bf16.msra.mxu0 0
        %943 = vmatprep.subr.bf16.mxu0 0
        %944 = vmatpush1.bf16.msra.mxu0 0
        %945 = vmatprep.mubr.bf16.mxu0 0
        %946 = vmatmul.mubr.bf16.gmra.mrb[0].mxu0 %v908
        %v947 = vpop.f32.mrb[0].mxu0
        %v948 = vadd.f32 0.0, %v947
        %v949 = vpop.f32.mrb[0].mxu0
        %v950 = vpop.f32.mrb[0].mxu0
        %v951 = vpop.f32.mrb[0].mxu0
        %952 = vdwg.mxu0
        %v953 = vpack.c.bf16 %v948, %v948
        %955 = vrot.lane.b32.xlu0 %v953, 16
        %v956 = vpop.permute.xlu0 %955
        %vm958 = vcmask 191616
        %959 = vst.msk [vmem:[#allocation2] sm:$0xf] %vm958, %v956
        %960 = vrot.lane.b32.xlu0 %v604, 104
        %v961 = vpop.permute.xlu0 %960
        %962 = vrot.lane.b32.xlu0 %v604, 72
        %v963 = vpop.permute.xlu0 %962
        %v965 = vsel %vm615, %v961, 0
        %v968 = vsel %vm615, %v963, 0
        %970 = vmatprep.subr.bf16.mxu0 0
        %971 = vmatpush1.bf16.xpose.msra.mxu0 %v968
        %972 = vmatprep.subr.bf16.mxu0 0
        %973 = vmatpush1.bf16.xpose.msra.mxu0 0
        %974 = vmatprep.subr.bf16.mxu0 0
        %975 = vmatpush1.bf16.xpose.msra.mxu0 0
        %976 = vmatprep.subr.bf16.mxu0 0
        %977 = vmatpush1.bf16.xpose.msra.mxu0 0
        %978 = vmatprep.subr.bf16.mxu0 0
        %979 = vmatpush1.bf16.xpose.msra.mxu0 0
        %980 = vmatprep.subr.bf16.mxu0 0
        %981 = vmatpush1.bf16.xpose.msra.mxu0 0
        %982 = vmatprep.subr.bf16.mxu0 0
        %983 = vmatpush1.bf16.xpose.msra.mxu0 0
        %984 = vmatprep.subr.bf16.mxu0 0
        %985 = vmatpush1.bf16.xpose.msra.mxu0 0
        %986 = vmatprep.subr.bf16.mxu0 0
        %987 = vmatpush1.bf16.xpose.msra.mxu0 0
        %988 = vmatprep.subr.bf16.mxu0 0
        %989 = vmatpush1.bf16.xpose.msra.mxu0 0
        %990 = vmatprep.subr.bf16.mxu0 0
        %991 = vmatpush1.bf16.xpose.msra.mxu0 0
        %992 = vmatprep.subr.bf16.mxu0 0
        %993 = vmatpush1.bf16.xpose.msra.mxu0 0
        %994 = vmatprep.subr.bf16.mxu0 0
        %995 = vmatpush1.bf16.xpose.msra.mxu0 0
        %996 = vmatprep.subr.bf16.mxu0 0
        %997 = vmatpush1.bf16.xpose.msra.mxu0 0
        %998 = vmatprep.subr.bf16.mxu0 0
        %999 = vmatpush1.bf16.xpose.msra.mxu0 0
        %1000 = vmatprep.subr.bf16.mxu0 0
        %1001 = vmatpush1.bf16.xpose.msra.mxu0 0
        %1002 = vmatprep.mubr.bf16.mxu0 0
        %1003 = vmatmul.mubr.bf16.gmra.mrb[0].mxu0 %v965
        %v1004 = vpop.f32.mrb[0].mxu0
        %v1005 = vadd.f32 %v610, %v1004
        %v1006 = vpop.f32.mrb[0].mxu0
        %v1007 = vpop.f32.mrb[0].mxu0
        %v1008 = vpop.f32.mrb[0].mxu0
        %1009 = vdwg.mxu0
        %v1010 = vsel %vm615, %v1005, -inf
        %1011 = vmax.xlane.f32.xlu0 %v1010
        %v1012 = vpop.xlane.xlu0 %1011
        %v1013 = vsub.f32 %v1005, %v1012
        %v1014 = vmul.f32 %v1013, 1.442695
        %v1015 = vpow.pop %v1014
        %v1016 = vsel %vm615, %v1015, 0.0
        %1017 = vadd.xlane.f32.xlu0 %v1016
        %v1018 = vpop.xlane.xlu0 %1017
        %v1019 = vrcp.pop %v1018
        %v1020 = vmul.f32 %v1015, %v1019
        %v1021 = vpack.c.bf16 %v1020, %v1020
        %1022 = vrot.lane.b32.xlu0 %v604, 40
        %v1023 = vpop.permute.xlu0 %1022
        %v1025 = vsel %vm615, %v1021, 0
        %v1028 = vsel %vm679, %v1023, 0
        %1030 = vmatprep.subr.bf16.mxu0 0
        %1031 = vmatpush1.bf16.msra.mxu0 %v1028
        %1032 = vmatprep.subr.bf16.mxu0 0
        %1033 = vmatpush1.bf16.msra.mxu0 0
        %1034 = vmatprep.subr.bf16.mxu0 0
        %1035 = vmatpush1.bf16.msra.mxu0 0
        %1036 = vmatprep.subr.bf16.mxu0 0
        %1037 = vmatpush1.bf16.msra.mxu0 0
        %1038 = vmatprep.subr.bf16.mxu0 0
        %1039 = vmatpush1.bf16.msra.mxu0 0
        %1040 = vmatprep.subr.bf16.mxu0 0
        %1041 = vmatpush1.bf16.msra.mxu0 0
        %1042 = vmatprep.subr.bf16.mxu0 0
        %1043 = vmatpush1.bf16.msra.mxu0 0
        %1044 = vmatprep.subr.bf16.mxu0 0
        %1045 = vmatpush1.bf16.msra.mxu0 0
        %1046 = vmatprep.subr.bf16.mxu0 0
        %1047 = vmatpush1.bf16.msra.mxu0 0
        %1048 = vmatprep.subr.bf16.mxu0 0
        %1049 = vmatpush1.bf16.msra.mxu0 0
        %1050 = vmatprep.subr.bf16.mxu0 0
        %1051 = vmatpush1.bf16.msra.mxu0 0
        %1052 = vmatprep.subr.bf16.mxu0 0
        %1053 = vmatpush1.bf16.msra.mxu0 0
        %1054 = vmatprep.subr.bf16.mxu0 0
        %1055 = vmatpush1.bf16.msra.mxu0 0
        %1056 = vmatprep.subr.bf16.mxu0 0
        %1057 = vmatpush1.bf16.msra.mxu0 0
        %1058 = vmatprep.subr.bf16.mxu0 0
        %1059 = vmatpush1.bf16.msra.mxu0 0
        %1060 = vmatprep.subr.bf16.mxu0 0
        %1061 = vmatpush1.bf16.msra.mxu0 0
        %1062 = vmatprep.mubr.bf16.mxu0 0
        %1063 = vmatmul.mubr.bf16.gmra.mrb[0].mxu0 %v1025
        %v1064 = vpop.f32.mrb[0].mxu0
        %v1065 = vadd.f32 0.0, %v1064
        %v1066 = vpop.f32.mrb[0].mxu0
        %v1067 = vpop.f32.mrb[0].mxu0
        %v1068 = vpop.f32.mrb[0].mxu0
        %1069 = vdwg.mxu0
        %v1070 = vpack.c.bf16 %v1065, %v1065
        %1072 = vrot.lane.b32.xlu0 %v1070, 24
        %v1073 = vpop.permute.xlu0 %1072
        %vm1075 = vcmask 257216
        %1076 = vst.msk [vmem:[#allocation2] sm:$0xf] %vm1075, %v1073
        %s1077 = scalar_lea.vmem %s450, 1
        %v1078 = vld [vmem:[%s1077] sm:$0x1]
        %v1080 = vlaneseq
        %v1081 = vshrl.u32 %v1080, 7
        %v1082 = vsub.s32 0, %v1081
        %v1083 = vrot.slane %v1078, %v1082
        %v1085 = vrot.slane %v604, 4
        %1086 = vrot.lane.b32.xlu0 %v1085, 96
        %v1087 = vpop.permute.xlu0 %1086
        %v1089 = vsel %vm615, %v1085, 0
        %v1092 = vsel %vm615, %v1087, 0
        %1094 = vmatprep.subr.bf16.mxu0 0
        %1095 = vmatpush1.bf16.xpose.msra.mxu0 %v1092
        %1096 = vmatprep.subr.bf16.mxu0 0
        %1097 = vmatpush1.bf16.xpose.msra.mxu0 0
        %1098 = vmatprep.subr.bf16.mxu0 0
        %1099 = vmatpush1.bf16.xpose.msra.mxu0 0
        %1100 = vmatprep.subr.bf16.mxu0 0
        %1101 = vmatpush1.bf16.xpose.msra.mxu0 0
        %1102 = vmatprep.subr.bf16.mxu0 0
        %1103 = vmatpush1.bf16.xpose.msra.mxu0 0
        %1104 = vmatprep.subr.bf16.mxu0 0
        %1105 = vmatpush1.bf16.xpose.msra.mxu0 0
        %1106 = vmatprep.subr.bf16.mxu0 0
        %1107 = vmatpush1.bf16.xpose.msra.mxu0 0
        %1108 = vmatprep.subr.bf16.mxu0 0
        %1109 = vmatpush1.bf16.xpose.msra.mxu0 0
        %1110 = vmatprep.subr.bf16.mxu0 0
        %1111 = vmatpush1.bf16.xpose.msra.mxu0 0
        %1112 = vmatprep.subr.bf16.mxu0 0
        %1113 = vmatpush1.bf16.xpose.msra.mxu0 0
        %1114 = vmatprep.subr.bf16.mxu0 0
        %1115 = vmatpush1.bf16.xpose.msra.mxu0 0
        %1116 = vmatprep.subr.bf16.mxu0 0
        %1117 = vmatpush1.bf16.xpose.msra.mxu0 0
        %1118 = vmatprep.subr.bf16.mxu0 0
        %1119 = vmatpush1.bf16.xpose.msra.mxu0 0
        %1120 = vmatprep.subr.bf16.mxu0 0
        %1121 = vmatpush1.bf16.xpose.msra.mxu0 0
        %1122 = vmatprep.subr.bf16.mxu0 0
        %1123 = vmatpush1.bf16.xpose.msra.mxu0 0
        %1124 = vmatprep.subr.bf16.mxu0 0
        %1125 = vmatpush1.bf16.xpose.msra.mxu0 0
        %1126 = vmatprep.mubr.bf16.mxu0 0
        %1127 = vmatmul.mubr.bf16.gmra.mrb[0].mxu0 %v1089
        %v1128 = vpop.f32.mrb[0].mxu0
        %v1129 = vadd.f32 %v1083, %v1128
        %v1130 = vpop.f32.mrb[0].mxu0
        %v1131 = vpop.f32.mrb[0].mxu0
        %v1132 = vpop.f32.mrb[0].mxu0
        %1133 = vdwg.mxu0
        %v1134 = vsel %vm615, %v1129, -inf
        %1135 = vmax.xlane.f32.xlu0 %v1134
        %v1136 = vpop.xlane.xlu0 %1135
        %v1137 = vsub.f32 %v1129, %v1136
        %v1138 = vmul.f32 %v1137, 1.442695
        %v1139 = vpow.pop %v1138
        %v1140 = vsel %vm615, %v1139, 0.0
        %1141 = vadd.xlane.f32.xlu0 %v1140
        %v1142 = vpop.xlane.xlu0 %1141
        %v1143 = vrcp.pop %v1142
        %v1144 = vmul.f32 %v1139, %v1143
        %v1145 = vpack.c.bf16 %v1144, %v1144
        %1146 = vrot.lane.b32.xlu0 %v1085, 64
        %v1147 = vpop.permute.xlu0 %1146
        %v1149 = vsel %vm615, %v1145, 0
        %v1152 = vsel %vm679, %v1147, 0
        %1154 = vmatprep.subr.bf16.mxu0 0
        %1155 = vmatpush1.bf16.msra.mxu0 %v1152
        %1156 = vmatprep.subr.bf16.mxu0 0
        %1157 = vmatpush1.bf16.msra.mxu0 0
        %1158 = vmatprep.subr.bf16.mxu0 0
        %1159 = vmatpush1.bf16.msra.mxu0 0
        %1160 = vmatprep.subr.bf16.mxu0 0
        %1161 = vmatpush1.bf16.msra.mxu0 0
        %1162 = vmatprep.subr.bf16.mxu0 0
        %1163 = vmatpush1.bf16.msra.mxu0 0
        %1164 = vmatprep.subr.bf16.mxu0 0
        %1165 = vmatpush1.bf16.msra.mxu0 0
        %1166 = vmatprep.subr.bf16.mxu0 0
        %1167 = vmatpush1.bf16.msra.mxu0 0
        %1168 = vmatprep.subr.bf16.mxu0 0
        %1169 = vmatpush1.bf16.msra.mxu0 0
        %1170 = vmatprep.subr.bf16.mxu0 0
        %1171 = vmatpush1.bf16.msra.mxu0 0
        %1172 = vmatprep.subr.bf16.mxu0 0
        %1173 = vmatpush1.bf16.msra.mxu0 0
        %1174 = vmatprep.subr.bf16.mxu0 0
        %1175 = vmatpush1.bf16.msra.mxu0 0
        %1176 = vmatprep.subr.bf16.mxu0 0
        %1177 = vmatpush1.bf16.msra.mxu0 0
        %1178 = vmatprep.subr.bf16.mxu0 0
        %1179 = vmatpush1.bf16.msra.mxu0 0
        %1180 = vmatprep.subr.bf16.mxu0 0
        %1181 = vmatpush1.bf16.msra.mxu0 0
        %1182 = vmatprep.subr.bf16.mxu0 0
        %1183 = vmatpush1.bf16.msra.mxu0 0
        %1184 = vmatprep.subr.bf16.mxu0 0
        %1185 = vmatpush1.bf16.msra.mxu0 0
        %1186 = vmatprep.mubr.bf16.mxu0 0
        %1187 = vmatmul.mubr.bf16.gmra.mrb[0].mxu0 %v1149
        %v1188 = vpop.f32.mrb[0].mxu0
        %v1189 = vadd.f32 0.0, %v1188
        %v1190 = vpop.f32.mrb[0].mxu0
        %v1191 = vpop.f32.mrb[0].mxu0
        %v1192 = vpop.f32.mrb[0].mxu0
        %1193 = vdwg.mxu0
        %v1194 = vpack.c.bf16 %v1189, %v1189
        %v1196 = vrot.slane %v1194, 4
        %vm1198 = vcmask 64516
        %1199 = vst.msk [vmem:[#allocation2] sm:$0xf0] %vm1198, %v1196
        %1200 = vrot.lane.b32.xlu0 %v1085, 120
        %v1201 = vpop.permute.xlu0 %1200
        %1202 = vrot.lane.b32.xlu0 %v1085, 88
        %v1203 = vpop.permute.xlu0 %1202
        %v1205 = vsel %vm615, %v1201, 0
        %v1208 = vsel %vm615, %v1203, 0
        %1210 = vmatprep.subr.bf16.mxu0 0
        %1211 = vmatpush1.bf16.xpose.msra.mxu0 %v1208
        %1212 = vmatprep.subr.bf16.mxu0 0
        %1213 = vmatpush1.bf16.xpose.msra.mxu0 0
        %1214 = vmatprep.subr.bf16.mxu0 0
        %1215 = vmatpush1.bf16.xpose.msra.mxu0 0
        %1216 = vmatprep.subr.bf16.mxu0 0
        %1217 = vmatpush1.bf16.xpose.msra.mxu0 0
        %1218 = vmatprep.subr.bf16.mxu0 0
        %1219 = vmatpush1.bf16.xpose.msra.mxu0 0
        %1220 = vmatprep.subr.bf16.mxu0 0
        %1221 = vmatpush1.bf16.xpose.msra.mxu0 0
        %1222 = vmatprep.subr.bf16.mxu0 0
        %1223 = vmatpush1.bf16.xpose.msra.mxu0 0
        %1224 = vmatprep.subr.bf16.mxu0 0
        %1225 = vmatpush1.bf16.xpose.msra.mxu0 0
        %1226 = vmatprep.subr.bf16.mxu0 0
        %1227 = vmatpush1.bf16.xpose.msra.mxu0 0
        %1228 = vmatprep.subr.bf16.mxu0 0
        %1229 = vmatpush1.bf16.xpose.msra.mxu0 0
        %1230 = vmatprep.subr.bf16.mxu0 0
        %1231 = vmatpush1.bf16.xpose.msra.mxu0 0
        %1232 = vmatprep.subr.bf16.mxu0 0
        %1233 = vmatpush1.bf16.xpose.msra.mxu0 0
        %1234 = vmatprep.subr.bf16.mxu0 0
        %1235 = vmatpush1.bf16.xpose.msra.mxu0 0
        %1236 = vmatprep.subr.bf16.mxu0 0
        %1237 = vmatpush1.bf16.xpose.msra.mxu0 0
        %1238 = vmatprep.subr.bf16.mxu0 0
        %1239 = vmatpush1.bf16.xpose.msra.mxu0 0
        %1240 = vmatprep.subr.bf16.mxu0 0
        %1241 = vmatpush1.bf16.xpose.msra.mxu0 0
        %1242 = vmatprep.mubr.bf16.mxu0 0
        %1243 = vmatmul.mubr.bf16.gmra.mrb[0].mxu0 %v1205
        %v1244 = vpop.f32.mrb[0].mxu0
        %v1245 = vadd.f32 %v1083, %v1244
        %v1246 = vpop.f32.mrb[0].mxu0
        %v1247 = vpop.f32.mrb[0].mxu0
        %v1248 = vpop.f32.mrb[0].mxu0
        %1249 = vdwg.mxu0
        %v1250 = vsel %vm615, %v1245, -inf
        %1251 = vmax.xlane.f32.xlu0 %v1250
        %v1252 = vpop.xlane.xlu0 %1251
        %v1253 = vsub.f32 %v1245, %v1252
        %v1254 = vmul.f32 %v1253, 1.442695
        %v1255 = vpow.pop %v1254
        %v1256 = vsel %vm615, %v1255, 0.0
        %1257 = vadd.xlane.f32.xlu0 %v1256
        %v1258 = vpop.xlane.xlu0 %1257
        %v1259 = vrcp.pop %v1258
        %v1260 = vmul.f32 %v1255, %v1259
        %v1261 = vpack.c.bf16 %v1260, %v1260
        %1262 = vrot.lane.b32.xlu0 %v1085, 56
        %v1263 = vpop.permute.xlu0 %1262
        %v1265 = vsel %vm615, %v1261, 0
        %v1268 = vsel %vm679, %v1263, 0
        %1270 = vmatprep.subr.bf16.mxu0 0
        %1271 = vmatpush1.bf16.msra.mxu0 %v1268
        %1272 = vmatprep.subr.bf16.mxu0 0
        %1273 = vmatpush1.bf16.msra.mxu0 0
        %1274 = vmatprep.subr.bf16.mxu0 0
        %1275 = vmatpush1.bf16.msra.mxu0 0
        %1276 = vmatprep.subr.bf16.mxu0 0
        %1277 = vmatpush1.bf16.msra.mxu0 0
        %1278 = vmatprep.subr.bf16.mxu0 0
        %1279 = vmatpush1.bf16.msra.mxu0 0
        %1280 = vmatprep.subr.bf16.mxu0 0
        %1281 = vmatpush1.bf16.msra.mxu0 0
        %1282 = vmatprep.subr.bf16.mxu0 0
        %1283 = vmatpush1.bf16.msra.mxu0 0
        %1284 = vmatprep.subr.bf16.mxu0 0
        %1285 = vmatpush1.bf16.msra.mxu0 0
        %1286 = vmatprep.subr.bf16.mxu0 0
        %1287 = vmatpush1.bf16.msra.mxu0 0
        %1288 = vmatprep.subr.bf16.mxu0 0
        %1289 = vmatpush1.bf16.msra.mxu0 0
        %1290 = vmatprep.subr.bf16.mxu0 0
        %1291 = vmatpush1.bf16.msra.mxu0 0
        %1292 = vmatprep.subr.bf16.mxu0 0
        %1293 = vmatpush1.bf16.msra.mxu0 0
        %1294 = vmatprep.subr.bf16.mxu0 0
        %1295 = vmatpush1.bf16.msra.mxu0 0
        %1296 = vmatprep.subr.bf16.mxu0 0
        %1297 = vmatpush1.bf16.msra.mxu0 0
        %1298 = vmatprep.subr.bf16.mxu0 0
        %1299 = vmatpush1.bf16.msra.mxu0 0
        %1300 = vmatprep.subr.bf16.mxu0 0
        %1301 = vmatpush1.bf16.msra.mxu0 0
        %1302 = vmatprep.mubr.bf16.mxu0 0
        %1303 = vmatmul.mubr.bf16.gmra.mrb[0].mxu0 %v1265
        %v1304 = vpop.f32.mrb[0].mxu0
        %v1305 = vadd.f32 0.0, %v1304
        %v1306 = vpop.f32.mrb[0].mxu0
        %v1307 = vpop.f32.mrb[0].mxu0
        %v1308 = vpop.f32.mrb[0].mxu0
        %1309 = vdwg.mxu0
        %v1310 = vpack.c.bf16 %v1305, %v1305
        %v1312 = vrot.slane %v1310, 4
        %1313 = vrot.lane.b32.xlu0 %v1312, 8
        %v1314 = vpop.permute.xlu0 %1313
        %vm1316 = vcmask 130116
        %1317 = vst.msk [vmem:[#allocation2] sm:$0xf0] %vm1316, %v1314
        %1318 = vrot.lane.b32.xlu0 %v1085, 112
        %v1319 = vpop.permute.xlu0 %1318
        %1320 = vrot.lane.b32.xlu0 %v1085, 80
        %v1321 = vpop.permute.xlu0 %1320
        %v1323 = vsel %vm615, %v1319, 0
        %v1326 = vsel %vm615, %v1321, 0
        %1328 = vmatprep.subr.bf16.mxu0 0
        %1329 = vmatpush1.bf16.xpose.msra.mxu0 %v1326
        %1330 = vmatprep.subr.bf16.mxu0 0
        %1331 = vmatpush1.bf16.xpose.msra.mxu0 0
        %1332 = vmatprep.subr.bf16.mxu0 0
        %1333 = vmatpush1.bf16.xpose.msra.mxu0 0
        %1334 = vmatprep.subr.bf16.mxu0 0
        %1335 = vmatpush1.bf16.xpose.msra.mxu0 0
        %1336 = vmatprep.subr.bf16.mxu0 0
        %1337 = vmatpush1.bf16.xpose.msra.mxu0 0
        %1338 = vmatprep.subr.bf16.mxu0 0
        %1339 = vmatpush1.bf16.xpose.msra.mxu0 0
        %1340 = vmatprep.subr.bf16.mxu0 0
        %1341 = vmatpush1.bf16.xpose.msra.mxu0 0
        %1342 = vmatprep.subr.bf16.mxu0 0
        %1343 = vmatpush1.bf16.xpose.msra.mxu0 0
        %1344 = vmatprep.subr.bf16.mxu0 0
        %1345 = vmatpush1.bf16.xpose.msra.mxu0 0
        %1346 = vmatprep.subr.bf16.mxu0 0
        %1347 = vmatpush1.bf16.xpose.msra.mxu0 0
        %1348 = vmatprep.subr.bf16.mxu0 0
        %1349 = vmatpush1.bf16.xpose.msra.mxu0 0
        %1350 = vmatprep.subr.bf16.mxu0 0
        %1351 = vmatpush1.bf16.xpose.msra.mxu0 0
        %1352 = vmatprep.subr.bf16.mxu0 0
        %1353 = vmatpush1.bf16.xpose.msra.mxu0 0
        %1354 = vmatprep.subr.bf16.mxu0 0
        %1355 = vmatpush1.bf16.xpose.msra.mxu0 0
        %1356 = vmatprep.subr.bf16.mxu0 0
        %1357 = vmatpush1.bf16.xpose.msra.mxu0 0
        %1358 = vmatprep.subr.bf16.mxu0 0
        %1359 = vmatpush1.bf16.xpose.msra.mxu0 0
        %1360 = vmatprep.mubr.bf16.mxu0 0
        %1361 = vmatmul.mubr.bf16.gmra.mrb[0].mxu0 %v1323
        %v1362 = vpop.f32.mrb[0].mxu0
        %v1363 = vadd.f32 %v1083, %v1362
        %v1364 = vpop.f32.mrb[0].mxu0
        %v1365 = vpop.f32.mrb[0].mxu0
        %v1366 = vpop.f32.mrb[0].mxu0
        %1367 = vdwg.mxu0
        %v1368 = vsel %vm615, %v1363, -inf
        %1369 = vmax.xlane.f32.xlu0 %v1368
        %v1370 = vpop.xlane.xlu0 %1369
        %v1371 = vsub.f32 %v1363, %v1370
        %v1372 = vmul.f32 %v1371, 1.442695
        %v1373 = vpow.pop %v1372
        %v1374 = vsel %vm615, %v1373, 0.0
        %1375 = vadd.xlane.f32.xlu0 %v1374
        %v1376 = vpop.xlane.xlu0 %1375
        %v1377 = vrcp.pop %v1376
        %v1378 = vmul.f32 %v1373, %v1377
        %v1379 = vpack.c.bf16 %v1378, %v1378
        %1380 = vrot.lane.b32.xlu0 %v1085, 48
        %v1381 = vpop.permute.xlu0 %1380
        %v1383 = vsel %vm615, %v1379, 0
        %v1386 = vsel %vm679, %v1381, 0
        %1388 = vmatprep.subr.bf16.mxu0 0
        %1389 = vmatpush1.bf16.msra.mxu0 %v1386
        %1390 = vmatprep.subr.bf16.mxu0 0
        %1391 = vmatpush1.bf16.msra.mxu0 0
        %1392 = vmatprep.subr.bf16.mxu0 0
        %1393 = vmatpush1.bf16.msra.mxu0 0
        %1394 = vmatprep.subr.bf16.mxu0 0
        %1395 = vmatpush1.bf16.msra.mxu0 0
        %1396 = vmatprep.subr.bf16.mxu0 0
        %1397 = vmatpush1.bf16.msra.mxu0 0
        %1398 = vmatprep.subr.bf16.mxu0 0
        %1399 = vmatpush1.bf16.msra.mxu0 0
        %1400 = vmatprep.subr.bf16.mxu0 0
        %1401 = vmatpush1.bf16.msra.mxu0 0
        %1402 = vmatprep.subr.bf16.mxu0 0
        %1403 = vmatpush1.bf16.msra.mxu0 0
        %1404 = vmatprep.subr.bf16.mxu0 0
        %1405 = vmatpush1.bf16.msra.mxu0 0
        %1406 = vmatprep.subr.bf16.mxu0 0
        %1407 = vmatpush1.bf16.msra.mxu0 0
        %1408 = vmatprep.subr.bf16.mxu0 0
        %1409 = vmatpush1.bf16.msra.mxu0 0
        %1410 = vmatprep.subr.bf16.mxu0 0
        %1411 = vmatpush1.bf16.msra.mxu0 0
        %1412 = vmatprep.subr.bf16.mxu0 0
        %1413 = vmatpush1.bf16.msra.mxu0 0
        %1414 = vmatprep.subr.bf16.mxu0 0
        %1415 = vmatpush1.bf16.msra.mxu0 0
        %1416 = vmatprep.subr.bf16.mxu0 0
        %1417 = vmatpush1.bf16.msra.mxu0 0
        %1418 = vmatprep.subr.bf16.mxu0 0
        %1419 = vmatpush1.bf16.msra.mxu0 0
        %1420 = vmatprep.mubr.bf16.mxu0 0
        %1421 = vmatmul.mubr.bf16.gmra.mrb[0].mxu0 %v1383
        %v1422 = vpop.f32.mrb[0].mxu0
        %v1423 = vadd.f32 0.0, %v1422
        %v1424 = vpop.f32.mrb[0].mxu0
        %v1425 = vpop.f32.mrb[0].mxu0
        %v1426 = vpop.f32.mrb[0].mxu0
        %1427 = vdwg.mxu0
        %v1428 = vpack.c.bf16 %v1423, %v1423
        %v1430 = vrot.slane %v1428, 4
        %1431 = vrot.lane.b32.xlu0 %v1430, 16
        %v1432 = vpop.permute.xlu0 %1431
        %vm1434 = vcmask 195716
        %1435 = vst.msk [vmem:[#allocation2] sm:$0xf0] %vm1434, %v1432
        %1436 = vrot.lane.b32.xlu0 %v1085, 104
        %v1437 = vpop.permute.xlu0 %1436
        %1438 = vrot.lane.b32.xlu0 %v1085, 72
        %v1439 = vpop.permute.xlu0 %1438
        %v1441 = vsel %vm615, %v1437, 0
        %v1444 = vsel %vm615, %v1439, 0
        %1446 = vmatprep.subr.bf16.mxu0 0
        %1447 = vmatpush1.bf16.xpose.msra.mxu0 %v1444
        %1448 = vmatprep.subr.bf16.mxu0 0
        %1449 = vmatpush1.bf16.xpose.msra.mxu0 0
        %1450 = vmatprep.subr.bf16.mxu0 0
        %1451 = vmatpush1.bf16.xpose.msra.mxu0 0
        %1452 = vmatprep.subr.bf16.mxu0 0
        %1453 = vmatpush1.bf16.xpose.msra.mxu0 0
        %1454 = vmatprep.subr.bf16.mxu0 0
        %1455 = vmatpush1.bf16.xpose.msra.mxu0 0
        %1456 = vmatprep.subr.bf16.mxu0 0
        %1457 = vmatpush1.bf16.xpose.msra.mxu0 0
        %1458 = vmatprep.subr.bf16.mxu0 0
        %1459 = vmatpush1.bf16.xpose.msra.mxu0 0
        %1460 = vmatprep.subr.bf16.mxu0 0
        %1461 = vmatpush1.bf16.xpose.msra.mxu0 0
        %1462 = vmatprep.subr.bf16.mxu0 0
        %1463 = vmatpush1.bf16.xpose.msra.mxu0 0
        %1464 = vmatprep.subr.bf16.mxu0 0
        %1465 = vmatpush1.bf16.xpose.msra.mxu0 0
        %1466 = vmatprep.subr.bf16.mxu0 0
        %1467 = vmatpush1.bf16.xpose.msra.mxu0 0
        %1468 = vmatprep.subr.bf16.mxu0 0
        %1469 = vmatpush1.bf16.xpose.msra.mxu0 0
        %1470 = vmatprep.subr.bf16.mxu0 0
        %1471 = vmatpush1.bf16.xpose.msra.mxu0 0
        %1472 = vmatprep.subr.bf16.mxu0 0
        %1473 = vmatpush1.bf16.xpose.msra.mxu0 0
        %1474 = vmatprep.subr.bf16.mxu0 0
        %1475 = vmatpush1.bf16.xpose.msra.mxu0 0
        %1476 = vmatprep.subr.bf16.mxu0 0
        %1477 = vmatpush1.bf16.xpose.msra.mxu0 0
        %1478 = vmatprep.mubr.bf16.mxu0 0
        %1479 = vmatmul.mubr.bf16.gmra.mrb[0].mxu0 %v1441
        %v1480 = vpop.f32.mrb[0].mxu0
        %v1481 = vadd.f32 %v1083, %v1480
        %v1482 = vpop.f32.mrb[0].mxu0
        %v1483 = vpop.f32.mrb[0].mxu0
        %v1484 = vpop.f32.mrb[0].mxu0
        %1485 = vdwg.mxu0
        %v1486 = vsel %vm615, %v1481, -inf
        %1487 = vmax.xlane.f32.xlu0 %v1486
        %v1488 = vpop.xlane.xlu0 %1487
        %v1489 = vsub.f32 %v1481, %v1488
        %v1490 = vmul.f32 %v1489, 1.442695
        %v1491 = vpow.pop %v1490
        %v1492 = vsel %vm615, %v1491, 0.0
        %1493 = vadd.xlane.f32.xlu0 %v1492
        %v1494 = vpop.xlane.xlu0 %1493
        %v1495 = vrcp.pop %v1494
        %v1496 = vmul.f32 %v1491, %v1495
        %v1497 = vpack.c.bf16 %v1496, %v1496
        %1498 = vrot.lane.b32.xlu0 %v1085, 40
        %v1499 = vpop.permute.xlu0 %1498
        %v1501 = vsel %vm615, %v1497, 0
        %v1504 = vsel %vm679, %v1499, 0
        %1506 = vmatprep.subr.bf16.mxu0 0
        %1507 = vmatpush1.bf16.msra.mxu0 %v1504
        %1508 = vmatprep.subr.bf16.mxu0 0
        %1509 = vmatpush1.bf16.msra.mxu0 0
        %1510 = vmatprep.subr.bf16.mxu0 0
        %1511 = vmatpush1.bf16.msra.mxu0 0
        %1512 = vmatprep.subr.bf16.mxu0 0
        %1513 = vmatpush1.bf16.msra.mxu0 0
        %1514 = vmatprep.subr.bf16.mxu0 0
        %1515 = vmatpush1.bf16.msra.mxu0 0
        %1516 = vmatprep.subr.bf16.mxu0 0
        %1517 = vmatpush1.bf16.msra.mxu0 0
        %1518 = vmatprep.subr.bf16.mxu0 0
        %1519 = vmatpush1.bf16.msra.mxu0 0
        %1520 = vmatprep.subr.bf16.mxu0 0
        %1521 = vmatpush1.bf16.msra.mxu0 0
        %1522 = vmatprep.subr.bf16.mxu0 0
        %1523 = vmatpush1.bf16.msra.mxu0 0
        %1524 = vmatprep.subr.bf16.mxu0 0
        %1525 = vmatpush1.bf16.msra.mxu0 0
        %1526 = vmatprep.subr.bf16.mxu0 0
        %1527 = vmatpush1.bf16.msra.mxu0 0
        %1528 = vmatprep.subr.bf16.mxu0 0
        %1529 = vmatpush1.bf16.msra.mxu0 0
        %1530 = vmatprep.subr.bf16.mxu0 0
        %1531 = vmatpush1.bf16.msra.mxu0 0
        %1532 = vmatprep.subr.bf16.mxu0 0
        %1533 = vmatpush1.bf16.msra.mxu0 0
        %1534 = vmatprep.subr.bf16.mxu0 0
        %1535 = vmatpush1.bf16.msra.mxu0 0
        %1536 = vmatprep.subr.bf16.mxu0 0
        %1537 = vmatpush1.bf16.msra.mxu0 0
        %1538 = vmatprep.mubr.bf16.mxu0 0
        %1539 = vmatmul.mubr.bf16.gmra.mrb[0].mxu0 %v1501
        %v1540 = vpop.f32.mrb[0].mxu0
        %v1541 = vadd.f32 0.0, %v1540
        %v1542 = vpop.f32.mrb[0].mxu0
        %v1543 = vpop.f32.mrb[0].mxu0
        %v1544 = vpop.f32.mrb[0].mxu0
        %1545 = vdwg.mxu0
        %v1546 = vpack.c.bf16 %v1541, %v1541
        %v1548 = vrot.slane %v1546, 4
        %1549 = vrot.lane.b32.xlu0 %v1548, 24
        %v1550 = vpop.permute.xlu0 %1549
        %vm1552 = vcmask 261316
        %1553 = vst.msk [vmem:[#allocation2] sm:$0xf0] %vm1552, %v1550
        %v1554 = vld [vmem:[#allocation2] sm:$0xff]
        %v1555 = vld [vmem:[%s464] sm:$0xf]
        %v1556 = vld [vmem:[%s464 + $0x4] sm:$0xf]
        %v1557 = vld [vmem:[%s464 + $0x8] sm:$0xf]
        %v1558 = vld [vmem:[%s464 + $0xc] sm:$0xf]
        %v1559 = vlaneseq
        %v1560 = vshrl.u32 %v1559, 7
        %v1561 = vsub.s32 4, %v1560
        %v1562 = vrot.slane %v495, %v1561
        %v1567 = vunpack.c.l.b16 %v1555
        %v1568 = vunpack.c.l.b16 %v1556
        %v1569 = vunpack.c.l.b16 %v1557
        %v1570 = vunpack.c.l.b16 %v1558
        %v1571 = vpack.c.b16 %v1568, %v1567
        %v1572 = vpack.c.b16 %v1570, %v1569
        %v1576 = vsel %vm496, %v1554, 0
        %1578 = vmatprep.subr.bf16.mxu0 0
        %1579 = vmatpush1.bf16.msra.mxu0 %v1571
        %1580 = vmatprep.subr.bf16.mxu0 0
        %1581 = vmatpush1.bf16.msra.mxu0 %v1572
        %1582 = vmatprep.subr.bf16.mxu0 0
        %1583 = vmatpush1.bf16.msra.mxu0 0
        %1584 = vmatprep.subr.bf16.mxu0 0
        %1585 = vmatpush1.bf16.msra.mxu0 0
        %1586 = vmatprep.subr.bf16.mxu0 0
        %1587 = vmatpush1.bf16.msra.mxu0 0
        %1588 = vmatprep.subr.bf16.mxu0 0
        %1589 = vmatpush1.bf16.msra.mxu0 0
        %1590 = vmatprep.subr.bf16.mxu0 0
        %1591 = vmatpush1.bf16.msra.mxu0 0
        %1592 = vmatprep.subr.bf16.mxu0 0
        %1593 = vmatpush1.bf16.msra.mxu0 0
        %1594 = vmatprep.subr.bf16.mxu0 0
        %1595 = vmatpush1.bf16.msra.mxu0 0
        %1596 = vmatprep.subr.bf16.mxu0 0
        %1597 = vmatpush1.bf16.msra.mxu0 0
        %1598 = vmatprep.subr.bf16.mxu0 0
        %1599 = vmatpush1.bf16.msra.mxu0 0
        %1600 = vmatprep.subr.bf16.mxu0 0
        %1601 = vmatpush1.bf16.msra.mxu0 0
        %1602 = vmatprep.subr.bf16.mxu0 0
        %1603 = vmatpush1.bf16.msra.mxu0 0
        %1604 = vmatprep.subr.bf16.mxu0 0
        %1605 = vmatpush1.bf16.msra.mxu0 0
        %1606 = vmatprep.subr.bf16.mxu0 0
        %1607 = vmatpush1.bf16.msra.mxu0 0
        %1608 = vmatprep.subr.bf16.mxu0 0
        %1609 = vmatpush1.bf16.msra.mxu0 0
        %1610 = vmatprep.mubr.bf16.mxu0 0
        %1611 = vmatmul.mubr.bf16.gmra.mrb[0].mxu0 %v1576
        %v1612 = vpop.f32.mrb[0].mxu0
        %v1613 = vadd.f32 %v1562, %v1612
        %v1614 = vpop.f32.mrb[0].mxu0
        %v1615 = vpop.f32.mrb[0].mxu0
        %v1616 = vadd.f32 %v1562, %v1615
        %v1617 = vpop.f32.mrb[0].mxu0
        %1618 = vdwg.mxu0
        %v1619 = vadd.f32 %v493, %v1613
        %v1620 = vadd.f32 %v494, %v1616
        %v1621 = vsel %vm496, %v1619, 0.0
        %1622 = vadd.xlane.f32.xlu0 %v1621
        %v1623 = vpop.xlane.xlu0 %1622
        %v1624 = vsel %vm496, %v1620, 0.0
        %1625 = vadd.xlane.f32.xlu0 %v1624
        %v1626 = vpop.xlane.xlu0 %1625
        %v1627 = vmul.f32 %v1623, %v503
        %v1628 = vmul.f32 %v1626, %v503
        %v1629 = vsub.f32 %v1619, %v1627
        %v1630 = vsub.f32 %v1620, %v1628
        %v1631 = vmul.f32 %v1629, %v1629
        %v1632 = vmul.f32 %v1630, %v1630
        %v1633 = vsel %vm496, %v1631, 0.0
        %1634 = vadd.xlane.f32.xlu0 %v1633
        %v1635 = vpop.xlane.xlu0 %1634
        %v1636 = vsel %vm496, %v1632, 0.0
        %1637 = vadd.xlane.f32.xlu0 %v1636
        %v1638 = vpop.xlane.xlu0 %1637
        %v1639 = vmul.f32 %v1635, %v503
        %v1640 = vmul.f32 %v1638, %v503
        %v1641 = vadd.f32 %v1639, 1e-05
        %v1642 = vadd.f32 %v1640, 1e-05
        %v1643 = vrsqrt.pop %v1641
        %v1644 = vrsqrt.pop %v1642
        %v1645 = vmul.f32 %v1629, %v1643
        %v1646 = vmul.f32 %v1630, %v1644
        %v1647 = vlaneseq
        %v1648 = vshrl.u32 %v1647, 7
        %v1649 = vsub.s32 2, %v1648
        %v1650 = vrot.slane %v495, %v1649
        %v1651 = vmul.f32 %v1645, %v1650
        %v1652 = vmul.f32 %v1646, %v1650
        %v1653 = vlaneseq
        %v1654 = vshrl.u32 %v1653, 7
        %v1655 = vsub.s32 3, %v1654
        %v1656 = vrot.slane %v495, %v1655
        %v1657 = vadd.f32 %v1651, %v1656
        %v1658 = vadd.f32 %v1652, %v1656
        %v1659 = vpack.c.bf16 %v1658, %v1657
        %v1660 = vld [vmem:[%s473] sm:$0xf]
        %v1661 = vld [vmem:[%s473 + $0x4] sm:$0xf]
        %v1662 = vld [vmem:[%s473 + $0x8] sm:$0xf]
        %v1663 = vld [vmem:[%s473 + $0xc] sm:$0xf]
        %v1664 = vld [vmem:[%s476] sm:$0x1]
        %v1666 = vlaneseq
        %v1667 = vshrl.u32 %v1666, 7
        %v1668 = vsub.s32 0, %v1667
        %v1669 = vrot.slane %v1664, %v1668
        %v1675 = vunpack.c.l.b16 %v1660
        %v1676 = vunpack.c.l.b16 %v1661
        %v1677 = vunpack.c.l.b16 %v1662
        %v1678 = vunpack.c.l.b16 %v1663
        %v1679 = vpack.c.b16 %v1676, %v1675
        %v1680 = vpack.c.b16 %v1678, %v1677
        %v1684 = vsel %vm496, %v1659, 0
        %1686 = vmatprep.subr.bf16.mxu0 0
        %1687 = vmatpush1.bf16.msra.mxu0 %v1679
        %1688 = vmatprep.subr.bf16.mxu0 0
        %1689 = vmatpush1.bf16.msra.mxu0 %v1680
        %1690 = vmatprep.subr.bf16.mxu0 0
        %1691 = vmatpush1.bf16.msra.mxu0 0
        %1692 = vmatprep.subr.bf16.mxu0 0
        %1693 = vmatpush1.bf16.msra.mxu0 0
        %1694 = vmatprep.subr.bf16.mxu0 0
        %1695 = vmatpush1.bf16.msra.mxu0 0
        %1696 = vmatprep.subr.bf16.mxu0 0
        %1697 = vmatpush1.bf16.msra.mxu0 0
        %1698 = vmatprep.subr.bf16.mxu0 0
        %1699 = vmatpush1.bf16.msra.mxu0 0
        %1700 = vmatprep.subr.bf16.mxu0 0
        %1701 = vmatpush1.bf16.msra.mxu0 0
        %1702 = vmatprep.subr.bf16.mxu0 0
        %1703 = vmatpush1.bf16.msra.mxu0 0
        %1704 = vmatprep.subr.bf16.mxu0 0
        %1705 = vmatpush1.bf16.msra.mxu0 0
        %1706 = vmatprep.subr.bf16.mxu0 0
        %1707 = vmatpush1.bf16.msra.mxu0 0
        %1708 = vmatprep.subr.bf16.mxu0 0
        %1709 = vmatpush1.bf16.msra.mxu0 0
        %1710 = vmatprep.subr.bf16.mxu0 0
        %1711 = vmatpush1.bf16.msra.mxu0 0
        %1712 = vmatprep.subr.bf16.mxu0 0
        %1713 = vmatpush1.bf16.msra.mxu0 0
        %1714 = vmatprep.subr.bf16.mxu0 0
        %1715 = vmatpush1.bf16.msra.mxu0 0
        %1716 = vmatprep.subr.bf16.mxu0 0
        %1717 = vmatpush1.bf16.msra.mxu0 0
        %1718 = vmatprep.mubr.bf16.mxu0 0
        %1719 = vmatmul.mubr.bf16.gmra.mrb[0].mxu0 %v1684
        %v1720 = vpop.f32.mrb[0].mxu0
        %v1721 = vadd.f32 %v1669, %v1720
        %v1722 = vpop.f32.mrb[0].mxu0
        %v1723 = vpop.f32.mrb[0].mxu0
        %v1724 = vadd.f32 %v1669, %v1723
        %v1725 = vpop.f32.mrb[0].mxu0
        %1726 = vdwg.mxu0
        %v1727 = vmul.f32 %v1721, 0.5
        %v1728 = vmul.f32 %v1724, 0.5
        %v1729 = vmul.f32 %v1721, 0.70710677
        %v1730 = vmul.f32 %v1724, 0.70710677
        %v1731 = verf.f32.pop %v1729
        %v1732 = verf.f32.pop %v1730
        %v1733 = vadd.f32 %v1731, 1.0
        %v1734 = vadd.f32 %v1732, 1.0
        %v1735 = vmul.f32 %v1727, %v1733
        %v1736 = vmul.f32 %v1728, %v1734
        %v1737 = vpack.c.bf16 %v1736, %v1735
        %v1738 = vld [vmem:[%s481] sm:$0xf]
        %v1739 = vld [vmem:[%s481 + $0x4] sm:$0xf]
        %v1740 = vld [vmem:[%s481 + $0x8] sm:$0xf]
        %v1741 = vld [vmem:[%s481 + $0xc] sm:$0xf]
        %v1742 = vld [vmem:[%s481 + $0x10] sm:$0xf]
        %v1743 = vld [vmem:[%s481 + $0x14] sm:$0xf]
        %v1744 = vld [vmem:[%s481 + $0x18] sm:$0xf]
        %v1745 = vld [vmem:[%s481 + $0x1c] sm:$0xf]
        %v1746 = vld [vmem:[%s481 + $0x20] sm:$0xf]
        %v1747 = vld [vmem:[%s481 + $0x24] sm:$0xf]
        %v1748 = vld [vmem:[%s481 + $0x28] sm:$0xf]
        %v1749 = vld [vmem:[%s481 + $0x2c] sm:$0xf]
        %v1750 = vld [vmem:[%s481 + $0x30] sm:$0xf]
        %v1751 = vld [vmem:[%s481 + $0x34] sm:$0xf]
        %v1752 = vld [vmem:[%s481 + $0x38] sm:$0xf]
        %v1753 = vld [vmem:[%s481 + $0x3c] sm:$0xf]
        %v1754 = vlaneseq
        %v1755 = vshrl.u32 %v1754, 7
        %v1756 = vsub.s32 5, %v1755
        %v1757 = vrot.slane %v495, %v1756
        %v1774 = vunpack.c.l.b16 %v1738
        %v1775 = vunpack.c.l.b16 %v1739
        %v1776 = vunpack.c.l.b16 %v1740
        %v1777 = vunpack.c.l.b16 %v1741
        %v1778 = vunpack.c.l.b16 %v1742
        %v1779 = vunpack.c.l.b16 %v1743
        %v1780 = vunpack.c.l.b16 %v1744
        %v1781 = vunpack.c.l.b16 %v1745
        %v1782 = vunpack.c.l.b16 %v1746
        %v1783 = vunpack.c.l.b16 %v1747
        %v1784 = vunpack.c.l.b16 %v1748
        %v1785 = vunpack.c.l.b16 %v1749
        %v1786 = vunpack.c.l.b16 %v1750
        %v1787 = vunpack.c.l.b16 %v1751
        %v1788 = vunpack.c.l.b16 %v1752
        %v1789 = vunpack.c.l.b16 %v1753
        %v1790 = vpack.c.b16 %v1775, %v1774
        %v1791 = vpack.c.b16 %v1777, %v1776
        %v1792 = vpack.c.b16 %v1779, %v1778
        %v1793 = vpack.c.b16 %v1781, %v1780
        %v1794 = vpack.c.b16 %v1783, %v1782
        %v1795 = vpack.c.b16 %v1785, %v1784
        %v1796 = vpack.c.b16 %v1787, %v1786
        %v1797 = vpack.c.b16 %v1789, %v1788
        %1806 = vmatprep.subr.bf16.mxu0 0
        %1807 = vmatpush1.bf16.msra.mxu0 %v1790
        %1808 = vmatprep.subr.bf16.mxu0 0
        %1809 = vmatpush1.bf16.msra.mxu0 %v1791
        %1810 = vmatprep.subr.bf16.mxu0 0
        %1811 = vmatpush1.bf16.msra.mxu0 %v1792
        %1812 = vmatprep.subr.bf16.mxu0 0
        %1813 = vmatpush1.bf16.msra.mxu0 %v1793
        %1814 = vmatprep.subr.bf16.mxu0 0
        %1815 = vmatpush1.bf16.msra.mxu0 %v1794
        %1816 = vmatprep.subr.bf16.mxu0 0
        %1817 = vmatpush1.bf16.msra.mxu0 %v1795
        %1818 = vmatprep.subr.bf16.mxu0 0
        %1819 = vmatpush1.bf16.msra.mxu0 %v1796
        %1820 = vmatprep.subr.bf16.mxu0 0
        %1821 = vmatpush1.bf16.msra.mxu0 %v1797
        %1822 = vmatprep.subr.bf16.mxu0 0
        %1823 = vmatpush1.bf16.msra.mxu0 0
        %1824 = vmatprep.subr.bf16.mxu0 0
        %1825 = vmatpush1.bf16.msra.mxu0 0
        %1826 = vmatprep.subr.bf16.mxu0 0
        %1827 = vmatpush1.bf16.msra.mxu0 0
        %1828 = vmatprep.subr.bf16.mxu0 0
        %1829 = vmatpush1.bf16.msra.mxu0 0
        %1830 = vmatprep.subr.bf16.mxu0 0
        %1831 = vmatpush1.bf16.msra.mxu0 0
        %1832 = vmatprep.subr.bf16.mxu0 0
        %1833 = vmatpush1.bf16.msra.mxu0 0
        %1834 = vmatprep.subr.bf16.mxu0 0
        %1835 = vmatpush1.bf16.msra.mxu0 0
        %1836 = vmatprep.subr.bf16.mxu0 0
        %1837 = vmatpush1.bf16.msra.mxu0 0
        %1838 = vmatprep.mubr.bf16.mxu0 0
        %1839 = vmatmul.mubr.bf16.gmra.mrb[0].mxu0 %v1737
        %v1840 = vpop.f32.mrb[0].mxu0
        %v1841 = vadd.f32 %v1757, %v1840
        %v1842 = vpop.f32.mrb[0].mxu0
        %v1843 = vpop.f32.mrb[0].mxu0
        %v1844 = vadd.f32 %v1757, %v1843
        %v1845 = vpop.f32.mrb[0].mxu0
        %1846 = vdwg.mxu0
        %v1847 = vadd.f32 %v1619, %v1841
        %v1848 = vadd.f32 %v1620, %v1844
        %1849 = vst.msk [vmem:[#allocation3] sm:$0xff] %vm496, %v1847
        %1850 = vst.msk [vmem:[#allocation3 + $0x8] sm:$0xff] %vm496, %v1848
        // Predicated region
        $region61: #{tpu_custom_call.1} parent=55 // pred_check
          %p1851 = pneg %p285
        $region62: #{tpu_custom_call.1} parent=55 // pred_check_branch
          %1853 = sbr.rel (%p1851) target = $region64
        $region63: #{tpu_custom_call.1} parent=55 // pred_region
          %s1854 = smul.u32 2, %s25
          %s1856 = ssub.s32 256, 256
          %1857 = vsyncadd [#allocation4], %s1856
          %s1858 = smul.addr %s1854, 128
          %s1859 = scalar_lea.hbm %s9, %s1858
          %s1860 = sshll.u32 [#allocation3], 4
          %s1861 = int_to_ptr.vmem [resolvable:$true] %s1860
          %1866 = dma.vmem_to_hbm [thread:$0]  %s1861, 256, %s1859, [#allocation4], 128, 128, 8
        $region64: #{tpu_custom_call.1} parent=55 // pred_fallthru
          _
        // Predicated region
        $region65: #{tpu_custom_call.1} parent=55 // pred_check
          %p1867 = pneg %p285
        $region66: #{tpu_custom_call.1} parent=55 // pred_check_branch
          %1869 = sbr.rel (%p1867) target = $region68
        $region67: #{tpu_custom_call.1} parent=55 // pred_region
          %1870 = dma.done [#allocation4], 256
        $region68: #{tpu_custom_call.1} parent=55 // pred_fallthru
          _
      $region56: #{tpu_custom_call.1} parent=5 // pred_fallthru
        _
      %p1871 = scmp.le.s32.totalorder 2, %s16
      // Predicated region
      $region69: #{tpu_custom_call.1} parent=5 // pred_check
        %p1872 = pneg %p1871
      $region70: #{tpu_custom_call.1} parent=5 // pred_check_branch
        %1874 = sbr.rel (%p1872) target = $region72
      $region71: #{tpu_custom_call.1} parent=5 // pred_region
        %s1875 = ssub.s32 %s16, 2
      $region72: #{tpu_custom_call.1} parent=5 // pred_fallthru
        _
    $region6: #{tpu_custom_call.1} parent=1 // loop_footer
      %s20 = sadd.s32 1, %s16
    $region7: #{tpu_custom_call.1} parent=1 // loop_footer_branch
      %15 = sbr.rel target = $region3
    $region8: #{tpu_custom_call.1} parent=1 // loop_exit
      _
    %1876 = vsyncpa [#allocation4], 1
    %s1877 = scalar_lea.sflag [#allocation4], 1
    %1878 = vsyncpa %s1877, 1

</llo_original>
